<compile_context>
chip_gen: v6e
topology: v6e:2x2x1
jax: 0.10.0
libtpu: 0.0.40
codegen_flags: <defaults>
</compile_context>

<pallas_src>
import functools

import jax
import jax.numpy as jnp
from jax.experimental import pallas as pl
from jax.experimental.pallas import tpu as pltpu


def _msag_kernel(x_ref, w3_ref, w5_ref, w7_ref, b3_ref, b5_ref, b7_ref,
                 o3_ref, o5_ref, o7_ref):
    """Fused 3-branch conv+ReLU on one batch block.

    x_ref : (Nb, Hp, Wp*Cin)      bf16, padded with the max halo (pad=3)
    wK_ref: (K, Wp*Cin, W*Cout)   bf16 banded weights (dx*Cin folded in)
    bK_ref: (1, W*Cout)           f32 bias tiled over W
    oK_ref: (Nb, H, W*Cout)       output slab (lane-dense over W*Cout)
    """
    nb, hp, wp_cin = x_ref.shape
    h = o3_ref.shape[1]
    wcout = o3_ref.shape[2]
    pad_max = (hp - h) // 2

    def branch(w_ref, b_ref, o_ref):
        k = w_ref.shape[0]
        offr = pad_max - k // 2
        # Bias folded into the accumulator init (no separate VPU add).
        acc = jnp.broadcast_to(b_ref[...], (nb * h, wcout)).astype(jnp.float32)
        for dy in range(k):  # K matmuls, contraction = Wp*Cin
            rows = x_ref[:, offr + dy:offr + dy + h, :]          # (Nb, H, Wp*Cin)
            rows = rows.reshape(nb * h, wp_cin)
            acc = acc + jnp.dot(rows, w_ref[dy],
                                preferred_element_type=jnp.float32)
        out = jnp.maximum(acc, 0.0)                              # ReLU (f32)
        o_ref[...] = out.reshape(nb, h, wcout).astype(o_ref.dtype)

    branch(w3_ref, b3_ref, o3_ref)
    branch(w5_ref, b5_ref, o5_ref)
    branch(w7_ref, b7_ref, o7_ref)


def _make_banded_weight(w_hwio, W, Wp, pad_max):
    """Build the banded matrix folding the (dx, Cin) window per kernel row.

    band[dy, wp*Cin + ci, w*Cout + co] = w_hwio[dy, wp - w - offc, ci, co]
    where offc = pad_max - K//2, zero outside the band.
    Returns (K, Wp*Cin, W*Cout).
    """
    K, _, Cin, Cout = w_hwio.shape
    offc = pad_max - K // 2
    wp_idx = jnp.arange(Wp)[None, :]            # (1, Wp)
    w_idx = jnp.arange(W)[:, None]              # (W, 1)
    dx = wp_idx - w_idx - offc                  # (W, Wp)
    valid = (dx >= 0) & (dx < K)
    dx_c = jnp.clip(dx, 0, K - 1)
    t = w_hwio[:, dx_c]                         # (K, W, Wp, Cin, Cout)
    t = jnp.where(valid[None, :, :, None, None], t, 0.0)
    t = jnp.transpose(t, (0, 2, 3, 1, 4))       # (K, Wp, Cin, W, Cout)
    return t.reshape(K, Wp * Cin, W * Cout)


def _pick_batch_block(n, batch_block):
    """Largest divisor of n <= batch_block, while keeping >=2 grid steps
    whenever n >= 2 (feeds both v7x TensorCores)."""
    cap = max(1, min(batch_block, n if n < 2 else n // 2))
    nb = 1
    for d in range(1, cap + 1):
        if n % d == 0:
            nb = d
    return nb


def msag_forward(params, x_nchw, *, batch_block=8):
    """MSAG forward: returns (branch1, branch2, branch3), each NCHW like PyTorch."""
    N, Cin, H, W = x_nchw.shape
    pad_max = 3                                  # 7x7 halo shared by all branches
    Hp, Wp = H + 2 * pad_max, W + 2 * pad_max

    # Pad once (shared halo), fuse (W, Cin) into the lane axis, cast to bf16.
    x_nhwc = jnp.transpose(x_nchw, (0, 2, 3, 1))
    x_pad = jnp.pad(x_nhwc, ((0, 0), (pad_max, pad_max), (pad_max, pad_max), (0, 0)))
    x2 = x_pad.reshape(N, Hp, Wp * Cin).astype(jnp.bfloat16)

    band_ws, bias_slabs, ks = [], [], []
    cout = None
    for name in ("branch1", "branch2", "branch3"):
        w, b = params[name]                      # (K, K, Cin, Cout), (Cout,)
        k = w.shape[0]
        c = w.shape[-1]
        assert cout is None or cout == c
        cout = c
        band_ws.append(_make_banded_weight(w, W, Wp, pad_max).astype(jnp.bfloat16))
        bias_slabs.append(jnp.tile(b, W).reshape(1, W * c).astype(jnp.float32))
        ks.append(k)

    wcout = W * cout
    nb = _pick_batch_block(N, batch_block)
    grid = (N // nb,)

    out_shape = tuple(jax.ShapeDtypeStruct((N, H, wcout), x_nchw.dtype)
                      for _ in range(3))
    out_specs = tuple(pl.BlockSpec((nb, H, wcout), lambda b: (b, 0, 0))
                      for _ in range(3))

    outs = pl.pallas_call(
        _msag_kernel,
        out_shape=out_shape,
        grid=grid,
        in_specs=[
            pl.BlockSpec((nb, Hp, Wp * Cin), lambda b: (b, 0, 0)),
            pl.BlockSpec((ks[0], Wp * Cin, wcout), lambda b: (0, 0, 0)),
            pl.BlockSpec((ks[1], Wp * Cin, wcout), lambda b: (0, 0, 0)),
            pl.BlockSpec((ks[2], Wp * Cin, wcout), lambda b: (0, 0, 0)),
            pl.BlockSpec((1, wcout), lambda b: (0, 0)),
            pl.BlockSpec((1, wcout), lambda b: (0, 0)),
            pl.BlockSpec((1, wcout), lambda b: (0, 0)),
        ],
        out_specs=out_specs,
        compiler_params=pltpu.CompilerParams(
            dimension_semantics=("parallel",)),
    )(x2, band_ws[0], band_ws[1], band_ws[2],
      bias_slabs[0], bias_slabs[1], bias_slabs[2])

    results = []
    for y in outs:
        y = y.reshape(N, H, W, cout)
        results.append(jnp.transpose(y, (0, 3, 1, 2)))  # back to NCHW
    return tuple(results)


def init_msag_params(key, in_channels, out_channels):
    """Deterministic PyTorch-Conv2d-style init (uniform +/- 1/sqrt(fan_in))."""
    params = {}
    for name, k in (("branch1", 3), ("branch2", 5), ("branch3", 7)):
        key, kw, kb = jax.random.split(key, 3)
        fan_in = in_channels * k * k
        bound = 1.0 / jnp.sqrt(jnp.float32(fan_in))
        w = jax.random.uniform(
            kw, (k, k, in_channels, out_channels), jnp.float32, -bound, bound)
        b = jax.random.uniform(kb, (out_channels,), jnp.float32, -bound, bound)
        params[name] = (w, b)
    return params


def _reference_branch(x_nchw, w_hwio, bias):
    """Plain-JAX f32 reference (for correctness check only)."""
    x_nhwc = jnp.transpose(x_nchw, (0, 2, 3, 1))
    y = jax.lax.conv_general_dilated(
        x_nhwc, w_hwio, window_strides=(1, 1), padding="SAME",
        dimension_numbers=("NHWC", "HWIO", "NHWC"),
    ) + bias[None, None, None, :]
    y = jnp.maximum(y, 0.0)
    return jnp.transpose(y, (0, 3, 1, 2))


if __name__ == "__main__":
    in_channels, out_channels = 4, 8
    N, H, W = 2, 16, 16

    key = jax.random.PRNGKey(0)
    key, kx = jax.random.split(key)
    x = jax.random.normal(kx, (N, in_channels, H, W), jnp.float32)

    params = init_msag_params(key, in_channels, out_channels)

    fwd = jax.jit(msag_forward)
    b1, b2, b3 = fwd(params, x)
    jax.block_until_ready((b1, b2, b3))

    # Sanity check against plain-JAX conv reference (bf16 MXU -> loosened tol).
    for out, name in ((b1, "branch1"), (b2, "branch2"), (b3, "branch3")):
        w, b = params[name]
        ref = _reference_branch(x, w, b)
        assert out.shape == (N, out_channels, H, W), name
        err = float(jnp.max(jnp.abs(out - ref)))
        assert jnp.allclose(out, ref, atol=3e-2, rtol=3e-2), (name, err)

    print("KERNEL_OK")
</pallas_src>

<mosaic_0001>
module attributes {stable_mosaic.version = 11 : i64} {
  func.func @_msag_kernel(%arg0: i32, %arg1: memref<1x22x88xbf16, #tpu.memory_space<vmem>>, %arg2: memref<3x88x128xbf16, #tpu.memory_space<vmem>>, %arg3: memref<5x88x128xbf16, #tpu.memory_space<vmem>>, %arg4: memref<7x88x128xbf16, #tpu.memory_space<vmem>>, %arg5: memref<1x128xf32, #tpu.memory_space<vmem>>, %arg6: memref<1x128xf32, #tpu.memory_space<vmem>>, %arg7: memref<1x128xf32, #tpu.memory_space<vmem>>, %arg8: memref<1x16x128xf32, #tpu.memory_space<vmem>>, %arg9: memref<1x16x128xf32, #tpu.memory_space<vmem>>, %arg10: memref<1x16x128xf32, #tpu.memory_space<vmem>>) attributes {dimension_semantics = [#tpu.dimension_semantics<parallel>], iteration_bounds = array<i64: 2>, scalar_prefetch = 0 : i64, scratch_operands = 0 : i64, tpu.core_type = #tpu.core_type<tc>, window_params = [{transform_indices = @transform_0, window_bounds = array<i64: 1, 22, 88>}, {pipeline_mode = #tpu.pipeline_mode<synchronous>, transform_indices = @transform_1, window_bounds = array<i64: 3, 88, 128>}, {pipeline_mode = #tpu.pipeline_mode<synchronous>, transform_indices = @transform_2, window_bounds = array<i64: 5, 88, 128>}, {pipeline_mode = #tpu.pipeline_mode<synchronous>, transform_indices = @transform_3, window_bounds = array<i64: 7, 88, 128>}, {pipeline_mode = #tpu.pipeline_mode<synchronous>, transform_indices = @transform_4, window_bounds = array<i64: 1, 128>}, {pipeline_mode = #tpu.pipeline_mode<synchronous>, transform_indices = @transform_5, window_bounds = array<i64: 1, 128>}, {pipeline_mode = #tpu.pipeline_mode<synchronous>, transform_indices = @transform_6, window_bounds = array<i64: 1, 128>}, {transform_indices = @transform_7, window_bounds = array<i64: 1, 16, 128>}, {transform_indices = @transform_8, window_bounds = array<i64: 1, 16, 128>}, {transform_indices = @transform_9, window_bounds = array<i64: 1, 16, 128>}]} {
    %c0 = arith.constant 0 : index
    %c0_0 = arith.constant 0 : index
    %0 = vector.load %arg5[%c0, %c0_0] : memref<1x128xf32, #tpu.memory_space<vmem>>, vector<1x128xf32>
    %1 = vector.shape_cast %0 : vector<1x128xf32> to vector<1x128xf32>
    %2 = vector.broadcast %1 : vector<1x128xf32> to vector<16x128xf32>
    %c0_1 = arith.constant 0 : index
    %c2 = arith.constant 2 : index
    %c0_2 = arith.constant 0 : index
    %3 = vector.load %arg1[%c0_1, %c2, %c0_2] : memref<1x22x88xbf16, #tpu.memory_space<vmem>>, vector<1x16x88xbf16>
    %4 = vector.shape_cast %3 : vector<1x16x88xbf16> to vector<16x88xbf16>
    %c0_3 = arith.constant 0 : index
    %c0_4 = arith.constant 0 : index
    %c0_5 = arith.constant 0 : index
    %5 = vector.load %arg2[%c0_3, %c0_4, %c0_5] : memref<3x88x128xbf16, #tpu.memory_space<vmem>>, vector<1x88x128xbf16>
    %6 = vector.shape_cast %5 : vector<1x88x128xbf16> to vector<88x128xbf16>
    %cst = arith.constant dense<0.000000e+00> : vector<16x128xf32>
    %7 = tpu.matmul %4, %6, %cst {dimension_numbers = #tpu.dot_dimension_numbers<[1], [0], [0], [1], [0, 0, 1, 1], [], []>} : vector<16x88xbf16>, vector<88x128xbf16>, vector<16x128xf32> -> vector<16x128xf32>
    %8 = arith.addf %2, %7 : vector<16x128xf32>
    %c0_6 = arith.constant 0 : index
    %c3 = arith.constant 3 : index
    %c0_7 = arith.constant 0 : index
    %9 = vector.load %arg1[%c0_6, %c3, %c0_7] : memref<1x22x88xbf16, #tpu.memory_space<vmem>>, vector<1x16x88xbf16>
    %10 = vector.shape_cast %9 : vector<1x16x88xbf16> to vector<16x88xbf16>
    %c1 = arith.constant 1 : index
    %c0_8 = arith.constant 0 : index
    %c0_9 = arith.constant 0 : index
    %11 = vector.load %arg2[%c1, %c0_8, %c0_9] : memref<3x88x128xbf16, #tpu.memory_space<vmem>>, vector<1x88x128xbf16>
    %12 = vector.shape_cast %11 : vector<1x88x128xbf16> to vector<88x128xbf16>
    %cst_10 = arith.constant dense<0.000000e+00> : vector<16x128xf32>
    %13 = tpu.matmul %10, %12, %cst_10 {dimension_numbers = #tpu.dot_dimension_numbers<[1], [0], [0], [1], [0, 0, 1, 1], [], []>} : vector<16x88xbf16>, vector<88x128xbf16>, vector<16x128xf32> -> vector<16x128xf32>
    %14 = arith.addf %8, %13 : vector<16x128xf32>
    %c0_11 = arith.constant 0 : index
    %c4 = arith.constant 4 : index
    %c0_12 = arith.constant 0 : index
    %15 = vector.load %arg1[%c0_11, %c4, %c0_12] : memref<1x22x88xbf16, #tpu.memory_space<vmem>>, vector<1x16x88xbf16>
    %16 = vector.shape_cast %15 : vector<1x16x88xbf16> to vector<16x88xbf16>
    %c2_13 = arith.constant 2 : index
    %c0_14 = arith.constant 0 : index
    %c0_15 = arith.constant 0 : index
    %17 = vector.load %arg2[%c2_13, %c0_14, %c0_15] : memref<3x88x128xbf16, #tpu.memory_space<vmem>>, vector<1x88x128xbf16>
    %18 = vector.shape_cast %17 : vector<1x88x128xbf16> to vector<88x128xbf16>
    %cst_16 = arith.constant dense<0.000000e+00> : vector<16x128xf32>
    %19 = tpu.matmul %16, %18, %cst_16 {dimension_numbers = #tpu.dot_dimension_numbers<[1], [0], [0], [1], [0, 0, 1, 1], [], []>} : vector<16x88xbf16>, vector<88x128xbf16>, vector<16x128xf32> -> vector<16x128xf32>
    %20 = arith.addf %14, %19 : vector<16x128xf32>
    %cst_17 = arith.constant 0.000000e+00 : f32
    %21 = vector.broadcast %cst_17 : f32 to vector<16x128xf32>
    %22 = arith.maximumf %20, %21 : vector<16x128xf32>
    %23 = vector.shape_cast %22 : vector<16x128xf32> to vector<1x16x128xf32>
    %c0_18 = arith.constant 0 : index
    %c0_19 = arith.constant 0 : index
    %c0_20 = arith.constant 0 : index
    %24 = vector.load %arg8[%c0_18, %c0_19, %c0_20] : memref<1x16x128xf32, #tpu.memory_space<vmem>>, vector<1x16x128xf32>
    tpu.vector_store %arg8[%c0_18, %c0_19, %c0_20], %23 {strides = array<i32>} : memref<1x16x128xf32, #tpu.memory_space<vmem>>, vector<1x16x128xf32>,
    %c0_21 = arith.constant 0 : index
    %c0_22 = arith.constant 0 : index
    %25 = vector.load %arg6[%c0_21, %c0_22] : memref<1x128xf32, #tpu.memory_space<vmem>>, vector<1x128xf32>
    %26 = vector.shape_cast %25 : vector<1x128xf32> to vector<1x128xf32>
    %27 = vector.broadcast %26 : vector<1x128xf32> to vector<16x128xf32>
    %c0_23 = arith.constant 0 : index
    %c1_24 = arith.constant 1 : index
    %c0_25 = arith.constant 0 : index
    %28 = vector.load %arg1[%c0_23, %c1_24, %c0_25] : memref<1x22x88xbf16, #tpu.memory_space<vmem>>, vector<1x16x88xbf16>
    %29 = vector.shape_cast %28 : vector<1x16x88xbf16> to vector<16x88xbf16>
    %c0_26 = arith.constant 0 : index
    %c0_27 = arith.constant 0 : index
    %c0_28 = arith.constant 0 : index
    %30 = vector.load %arg3[%c0_26, %c0_27, %c0_28] : memref<5x88x128xbf16, #tpu.memory_space<vmem>>, vector<1x88x128xbf16>
    %31 = vector.shape_cast %30 : vector<1x88x128xbf16> to vector<88x128xbf16>
    %cst_29 = arith.constant dense<0.000000e+00> : vector<16x128xf32>
    %32 = tpu.matmul %29, %31, %cst_29 {dimension_numbers = #tpu.dot_dimension_numbers<[1], [0], [0], [1], [0, 0, 1, 1], [], []>} : vector<16x88xbf16>, vector<88x128xbf16>, vector<16x128xf32> -> vector<16x128xf32>
    %33 = arith.addf %27, %32 : vector<16x128xf32>
    %c0_30 = arith.constant 0 : index
    %c2_31 = arith.constant 2 : index
    %c0_32 = arith.constant 0 : index
    %34 = vector.load %arg1[%c0_30, %c2_31, %c0_32] : memref<1x22x88xbf16, #tpu.memory_space<vmem>>, vector<1x16x88xbf16>
    %35 = vector.shape_cast %34 : vector<1x16x88xbf16> to vector<16x88xbf16>
    %c1_33 = arith.constant 1 : index
    %c0_34 = arith.constant 0 : index
    %c0_35 = arith.constant 0 : index
    %36 = vector.load %arg3[%c1_33, %c0_34, %c0_35] : memref<5x88x128xbf16, #tpu.memory_space<vmem>>, vector<1x88x128xbf16>
    %37 = vector.shape_cast %36 : vector<1x88x128xbf16> to vector<88x128xbf16>
    %cst_36 = arith.constant dense<0.000000e+00> : vector<16x128xf32>
    %38 = tpu.matmul %35, %37, %cst_36 {dimension_numbers = #tpu.dot_dimension_numbers<[1], [0], [0], [1], [0, 0, 1, 1], [], []>} : vector<16x88xbf16>, vector<88x128xbf16>, vector<16x128xf32> -> vector<16x128xf32>
    %39 = arith.addf %33, %38 : vector<16x128xf32>
    %c0_37 = arith.constant 0 : index
    %c3_38 = arith.constant 3 : index
    %c0_39 = arith.constant 0 : index
    %40 = vector.load %arg1[%c0_37, %c3_38, %c0_39] : memref<1x22x88xbf16, #tpu.memory_space<vmem>>, vector<1x16x88xbf16>
    %41 = vector.shape_cast %40 : vector<1x16x88xbf16> to vector<16x88xbf16>
    %c2_40 = arith.constant 2 : index
    %c0_41 = arith.constant 0 : index
    %c0_42 = arith.constant 0 : index
    %42 = vector.load %arg3[%c2_40, %c0_41, %c0_42] : memref<5x88x128xbf16, #tpu.memory_space<vmem>>, vector<1x88x128xbf16>
    %43 = vector.shape_cast %42 : vector<1x88x128xbf16> to vector<88x128xbf16>
    %cst_43 = arith.constant dense<0.000000e+00> : vector<16x128xf32>
    %44 = tpu.matmul %41, %43, %cst_43 {dimension_numbers = #tpu.dot_dimension_numbers<[1], [0], [0], [1], [0, 0, 1, 1], [], []>} : vector<16x88xbf16>, vector<88x128xbf16>, vector<16x128xf32> -> vector<16x128xf32>
    %45 = arith.addf %39, %44 : vector<16x128xf32>
    %c0_44 = arith.constant 0 : index
    %c4_45 = arith.constant 4 : index
    %c0_46 = arith.constant 0 : index
    %46 = vector.load %arg1[%c0_44, %c4_45, %c0_46] : memref<1x22x88xbf16, #tpu.memory_space<vmem>>, vector<1x16x88xbf16>
    %47 = vector.shape_cast %46 : vector<1x16x88xbf16> to vector<16x88xbf16>
    %c3_47 = arith.constant 3 : index
    %c0_48 = arith.constant 0 : index
    %c0_49 = arith.constant 0 : index
    %48 = vector.load %arg3[%c3_47, %c0_48, %c0_49] : memref<5x88x128xbf16, #tpu.memory_space<vmem>>, vector<1x88x128xbf16>
    %49 = vector.shape_cast %48 : vector<1x88x128xbf16> to vector<88x128xbf16>
    %cst_50 = arith.constant dense<0.000000e+00> : vector<16x128xf32>
    %50 = tpu.matmul %47, %49, %cst_50 {dimension_numbers = #tpu.dot_dimension_numbers<[1], [0], [0], [1], [0, 0, 1, 1], [], []>} : vector<16x88xbf16>, vector<88x128xbf16>, vector<16x128xf32> -> vector<16x128xf32>
    %51 = arith.addf %45, %50 : vector<16x128xf32>
    %c0_51 = arith.constant 0 : index
    %c5 = arith.constant 5 : index
    %c0_52 = arith.constant 0 : index
    %52 = vector.load %arg1[%c0_51, %c5, %c0_52] : memref<1x22x88xbf16, #tpu.memory_space<vmem>>, vector<1x16x88xbf16>
    %53 = vector.shape_cast %52 : vector<1x16x88xbf16> to vector<16x88xbf16>
    %c4_53 = arith.constant 4 : index
    %c0_54 = arith.constant 0 : index
    %c0_55 = arith.constant 0 : index
    %54 = vector.load %arg3[%c4_53, %c0_54, %c0_55] : memref<5x88x128xbf16, #tpu.memory_space<vmem>>, vector<1x88x128xbf16>
    %55 = vector.shape_cast %54 : vector<1x88x128xbf16> to vector<88x128xbf16>
    %cst_56 = arith.constant dense<0.000000e+00> : vector<16x128xf32>
    %56 = tpu.matmul %53, %55, %cst_56 {dimension_numbers = #tpu.dot_dimension_numbers<[1], [0], [0], [1], [0, 0, 1, 1], [], []>} : vector<16x88xbf16>, vector<88x128xbf16>, vector<16x128xf32> -> vector<16x128xf32>
    %57 = arith.addf %51, %56 : vector<16x128xf32>
    %cst_57 = arith.constant 0.000000e+00 : f32
    %58 = vector.broadcast %cst_57 : f32 to vector<16x128xf32>
    %59 = arith.maximumf %57, %58 : vector<16x128xf32>
    %60 = vector.shape_cast %59 : vector<16x128xf32> to vector<1x16x128xf32>
    %c0_58 = arith.constant 0 : index
    %c0_59 = arith.constant 0 : index
    %c0_60 = arith.constant 0 : index
    %61 = vector.load %arg9[%c0_58, %c0_59, %c0_60] : memref<1x16x128xf32, #tpu.memory_space<vmem>>, vector<1x16x128xf32>
    tpu.vector_store %arg9[%c0_58, %c0_59, %c0_60], %60 {strides = array<i32>} : memref<1x16x128xf32, #tpu.memory_space<vmem>>, vector<1x16x128xf32>,
    %c0_61 = arith.constant 0 : index
    %c0_62 = arith.constant 0 : index
    %62 = vector.load %arg7[%c0_61, %c0_62] : memref<1x128xf32, #tpu.memory_space<vmem>>, vector<1x128xf32>
    %63 = vector.shape_cast %62 : vector<1x128xf32> to vector<1x128xf32>
    %64 = vector.broadcast %63 : vector<1x128xf32> to vector<16x128xf32>
    %c0_63 = arith.constant 0 : index
    %c0_64 = arith.constant 0 : index
    %c0_65 = arith.constant 0 : index
    %65 = vector.load %arg1[%c0_63, %c0_64, %c0_65] : memref<1x22x88xbf16, #tpu.memory_space<vmem>>, vector<1x16x88xbf16>
    %66 = vector.shape_cast %65 : vector<1x16x88xbf16> to vector<16x88xbf16>
    %c0_66 = arith.constant 0 : index
    %c0_67 = arith.constant 0 : index
    %c0_68 = arith.constant 0 : index
    %67 = vector.load %arg4[%c0_66, %c0_67, %c0_68] : memref<7x88x128xbf16, #tpu.memory_space<vmem>>, vector<1x88x128xbf16>
    %68 = vector.shape_cast %67 : vector<1x88x128xbf16> to vector<88x128xbf16>
    %cst_69 = arith.constant dense<0.000000e+00> : vector<16x128xf32>
    %69 = tpu.matmul %66, %68, %cst_69 {dimension_numbers = #tpu.dot_dimension_numbers<[1], [0], [0], [1], [0, 0, 1, 1], [], []>} : vector<16x88xbf16>, vector<88x128xbf16>, vector<16x128xf32> -> vector<16x128xf32>
    %70 = arith.addf %64, %69 : vector<16x128xf32>
    %c0_70 = arith.constant 0 : index
    %c1_71 = arith.constant 1 : index
    %c0_72 = arith.constant 0 : index
    %71 = vector.load %arg1[%c0_70, %c1_71, %c0_72] : memref<1x22x88xbf16, #tpu.memory_space<vmem>>, vector<1x16x88xbf16>
    %72 = vector.shape_cast %71 : vector<1x16x88xbf16> to vector<16x88xbf16>
    %c1_73 = arith.constant 1 : index
    %c0_74 = arith.constant 0 : index
    %c0_75 = arith.constant 0 : index
    %73 = vector.load %arg4[%c1_73, %c0_74, %c0_75] : memref<7x88x128xbf16, #tpu.memory_space<vmem>>, vector<1x88x128xbf16>
    %74 = vector.shape_cast %73 : vector<1x88x128xbf16> to vector<88x128xbf16>
    %cst_76 = arith.constant dense<0.000000e+00> : vector<16x128xf32>
    %75 = tpu.matmul %72, %74, %cst_76 {dimension_numbers = #tpu.dot_dimension_numbers<[1], [0], [0], [1], [0, 0, 1, 1], [], []>} : vector<16x88xbf16>, vector<88x128xbf16>, vector<16x128xf32> -> vector<16x128xf32>
    %76 = arith.addf %70, %75 : vector<16x128xf32>
    %c0_77 = arith.constant 0 : index
    %c2_78 = arith.constant 2 : index
    %c0_79 = arith.constant 0 : index
    %77 = vector.load %arg1[%c0_77, %c2_78, %c0_79] : memref<1x22x88xbf16, #tpu.memory_space<vmem>>, vector<1x16x88xbf16>
    %78 = vector.shape_cast %77 : vector<1x16x88xbf16> to vector<16x88xbf16>
    %c2_80 = arith.constant 2 : index
    %c0_81 = arith.constant 0 : index
    %c0_82 = arith.constant 0 : index
    %79 = vector.load %arg4[%c2_80, %c0_81, %c0_82] : memref<7x88x128xbf16, #tpu.memory_space<vmem>>, vector<1x88x128xbf16>
    %80 = vector.shape_cast %79 : vector<1x88x128xbf16> to vector<88x128xbf16>
    %cst_83 = arith.constant dense<0.000000e+00> : vector<16x128xf32>
    %81 = tpu.matmul %78, %80, %cst_83 {dimension_numbers = #tpu.dot_dimension_numbers<[1], [0], [0], [1], [0, 0, 1, 1], [], []>} : vector<16x88xbf16>, vector<88x128xbf16>, vector<16x128xf32> -> vector<16x128xf32>
    %82 = arith.addf %76, %81 : vector<16x128xf32>
    %c0_84 = arith.constant 0 : index
    %c3_85 = arith.constant 3 : index
    %c0_86 = arith.constant 0 : index
    %83 = vector.load %arg1[%c0_84, %c3_85, %c0_86] : memref<1x22x88xbf16, #tpu.memory_space<vmem>>, vector<1x16x88xbf16>
    %84 = vector.shape_cast %83 : vector<1x16x88xbf16> to vector<16x88xbf16>
    %c3_87 = arith.constant 3 : index
    %c0_88 = arith.constant 0 : index
    %c0_89 = arith.constant 0 : index
    %85 = vector.load %arg4[%c3_87, %c0_88, %c0_89] : memref<7x88x128xbf16, #tpu.memory_space<vmem>>, vector<1x88x128xbf16>
    %86 = vector.shape_cast %85 : vector<1x88x128xbf16> to vector<88x128xbf16>
    %cst_90 = arith.constant dense<0.000000e+00> : vector<16x128xf32>
    %87 = tpu.matmul %84, %86, %cst_90 {dimension_numbers = #tpu.dot_dimension_numbers<[1], [0], [0], [1], [0, 0, 1, 1], [], []>} : vector<16x88xbf16>, vector<88x128xbf16>, vector<16x128xf32> -> vector<16x128xf32>
    %88 = arith.addf %82, %87 : vector<16x128xf32>
    %c0_91 = arith.constant 0 : index
    %c4_92 = arith.constant 4 : index
    %c0_93 = arith.constant 0 : index
    %89 = vector.load %arg1[%c0_91, %c4_92, %c0_93] : memref<1x22x88xbf16, #tpu.memory_space<vmem>>, vector<1x16x88xbf16>
    %90 = vector.shape_cast %89 : vector<1x16x88xbf16> to vector<16x88xbf16>
    %c4_94 = arith.constant 4 : index
    %c0_95 = arith.constant 0 : index
    %c0_96 = arith.constant 0 : index
    %91 = vector.load %arg4[%c4_94, %c0_95, %c0_96] : memref<7x88x128xbf16, #tpu.memory_space<vmem>>, vector<1x88x128xbf16>
    %92 = vector.shape_cast %91 : vector<1x88x128xbf16> to vector<88x128xbf16>
    %cst_97 = arith.constant dense<0.000000e+00> : vector<16x128xf32>
    %93 = tpu.matmul %90, %92, %cst_97 {dimension_numbers = #tpu.dot_dimension_numbers<[1], [0], [0], [1], [0, 0, 1, 1], [], []>} : vector<16x88xbf16>, vector<88x128xbf16>, vector<16x128xf32> -> vector<16x128xf32>
    %94 = arith.addf %88, %93 : vector<16x128xf32>
    %c0_98 = arith.constant 0 : index
    %c5_99 = arith.constant 5 : index
    %c0_100 = arith.constant 0 : index
    %95 = vector.load %arg1[%c0_98, %c5_99, %c0_100] : memref<1x22x88xbf16, #tpu.memory_space<vmem>>, vector<1x16x88xbf16>
    %96 = vector.shape_cast %95 : vector<1x16x88xbf16> to vector<16x88xbf16>
    %c5_101 = arith.constant 5 : index
    %c0_102 = arith.constant 0 : index
    %c0_103 = arith.constant 0 : index
    %97 = vector.load %arg4[%c5_101, %c0_102, %c0_103] : memref<7x88x128xbf16, #tpu.memory_space<vmem>>, vector<1x88x128xbf16>
    %98 = vector.shape_cast %97 : vector<1x88x128xbf16> to vector<88x128xbf16>
    %cst_104 = arith.constant dense<0.000000e+00> : vector<16x128xf32>
    %99 = tpu.matmul %96, %98, %cst_104 {dimension_numbers = #tpu.dot_dimension_numbers<[1], [0], [0], [1], [0, 0, 1, 1], [], []>} : vector<16x88xbf16>, vector<88x128xbf16>, vector<16x128xf32> -> vector<16x128xf32>
    %100 = arith.addf %94, %99 : vector<16x128xf32>
    %c0_105 = arith.constant 0 : index
    %c6 = arith.constant 6 : index
    %c0_106 = arith.constant 0 : index
    %101 = vector.load %arg1[%c0_105, %c6, %c0_106] : memref<1x22x88xbf16, #tpu.memory_space<vmem>>, vector<1x16x88xbf16>
    %102 = vector.shape_cast %101 : vector<1x16x88xbf16> to vector<16x88xbf16>
    %c6_107 = arith.constant 6 : index
    %c0_108 = arith.constant 0 : index
    %c0_109 = arith.constant 0 : index
    %103 = vector.load %arg4[%c6_107, %c0_108, %c0_109] : memref<7x88x128xbf16, #tpu.memory_space<vmem>>, vector<1x88x128xbf16>
    %104 = vector.shape_cast %103 : vector<1x88x128xbf16> to vector<88x128xbf16>
    %cst_110 = arith.constant dense<0.000000e+00> : vector<16x128xf32>
    %105 = tpu.matmul %102, %104, %cst_110 {dimension_numbers = #tpu.dot_dimension_numbers<[1], [0], [0], [1], [0, 0, 1, 1], [], []>} : vector<16x88xbf16>, vector<88x128xbf16>, vector<16x128xf32> -> vector<16x128xf32>
    %106 = arith.addf %100, %105 : vector<16x128xf32>
    %cst_111 = arith.constant 0.000000e+00 : f32
    %107 = vector.broadcast %cst_111 : f32 to vector<16x128xf32>
    %108 = arith.maximumf %106, %107 : vector<16x128xf32>
    %109 = vector.shape_cast %108 : vector<16x128xf32> to vector<1x16x128xf32>
    %c0_112 = arith.constant 0 : index
    %c0_113 = arith.constant 0 : index
    %c0_114 = arith.constant 0 : index
    %110 = vector.load %arg10[%c0_112, %c0_113, %c0_114] : memref<1x16x128xf32, #tpu.memory_space<vmem>>, vector<1x16x128xf32>
    tpu.vector_store %arg10[%c0_112, %c0_113, %c0_114], %109 {strides = array<i32>} : memref<1x16x128xf32, #tpu.memory_space<vmem>>, vector<1x16x128xf32>,
    return
  }
  func.func @transform_0(%arg0: i32) -> (i32, i32, i32) {
    %c0_i32 = arith.constant 0 : i32
    %c0_i32_0 = arith.constant 0 : i32
    %c0_i32_1 = arith.constant 0 : i32
    return %arg0, %c0_i32, %c0_i32_0 : i32, i32, i32
  }
  func.func @transform_1(%arg0: i32) -> (i32, i32, i32) {
    %c0_i32 = arith.constant 0 : i32
    %c0_i32_0 = arith.constant 0 : i32
    %c0_i32_1 = arith.constant 0 : i32
    %c0_i32_2 = arith.constant 0 : i32
    return %c0_i32, %c0_i32_0, %c0_i32_1 : i32, i32, i32
  }
  func.func @transform_2(%arg0: i32) -> (i32, i32, i32) {
    %c0_i32 = arith.constant 0 : i32
    %c0_i32_0 = arith.constant 0 : i32
    %c0_i32_1 = arith.constant 0 : i32
    %c0_i32_2 = arith.constant 0 : i32
    return %c0_i32, %c0_i32_0, %c0_i32_1 : i32, i32, i32
  }
  func.func @transform_3(%arg0: i32) -> (i32, i32, i32) {
    %c0_i32 = arith.constant 0 : i32
    %c0_i32_0 = arith.constant 0 : i32
    %c0_i32_1 = arith.constant 0 : i32
    %c0_i32_2 = arith.constant 0 : i32
    return %c0_i32, %c0_i32_0, %c0_i32_1 : i32, i32, i32
  }
  func.func @transform_4(%arg0: i32) -> (i32, i32) {
    %c0_i32 = arith.constant 0 : i32
    %c0_i32_0 = arith.constant 0 : i32
    %c0_i32_1 = arith.constant 0 : i32
    return %c0_i32, %c0_i32_0 : i32, i32
  }
  func.func @transform_5(%arg0: i32) -> (i32, i32) {
    %c0_i32 = arith.constant 0 : i32
    %c0_i32_0 = arith.constant 0 : i32
    %c0_i32_1 = arith.constant 0 : i32
    return %c0_i32, %c0_i32_0 : i32, i32
  }
  func.func @transform_6(%arg0: i32) -> (i32, i32) {
    %c0_i32 = arith.constant 0 : i32
    %c0_i32_0 = arith.constant 0 : i32
    %c0_i32_1 = arith.constant 0 : i32
    return %c0_i32, %c0_i32_0 : i32, i32
  }
  func.func @transform_7(%arg0: i32) -> (i32, i32, i32) {
    %c0_i32 = arith.constant 0 : i32
    %c0_i32_0 = arith.constant 0 : i32
    %c0_i32_1 = arith.constant 0 : i32
    return %arg0, %c0_i32, %c0_i32_0 : i32, i32, i32
  }
  func.func @transform_8(%arg0: i32) -> (i32, i32, i32) {
    %c0_i32 = arith.constant 0 : i32
    %c0_i32_0 = arith.constant 0 : i32
    %c0_i32_1 = arith.constant 0 : i32
    return %arg0, %c0_i32, %c0_i32_0 : i32, i32, i32
  }
  func.func @transform_9(%arg0: i32) -> (i32, i32, i32) {
    %c0_i32 = arith.constant 0 : i32
    %c0_i32_0 = arith.constant 0 : i32
    %c0_i32_1 = arith.constant 0 : i32
    return %arg0, %c0_i32, %c0_i32_0 : i32, i32, i32
  }
}

</mosaic_0001>

<llo_original>
// kernel: tile.18
$region0: #{tile.18}
  #allocation0 [shape = 's32[1]{0}', space=sflag, size = 0x4, scoped, tag = 'scoped memory for tile.18']
  %s0 = inlined_call_operand.vmem [shape: f32[8], index: 0, kind: input, shape index: {}]
  %s1 = inlined_call_operand.vmem [shape: f32[16,8], index: 1, kind: output, shape index: {}]
  // Predicated region
  $region2: #{tile.18} parent=0 // pred_check
    _
  $region3: #{tile.18} parent=0 // pred_check_branch
    %3 = sbr.rel (0) target = $region5
  $region4: #{tile.18} parent=0 // pred_region
    _
  $region5: #{tile.18} parent=0 // pred_fallthru
    _
  %v4 = vld [vmem:[%s0] ss:$0 sm:$0xff]
  %5 = vst [vmem:[%s1] sm:$0xff] %v4
  %s6 = scalar_lea.vmem %s1, 8
  %7 = vst [vmem:[%s6] sm:$0xff] %v4

// kernel: tile.19
$region0: #{tile.19}
  %s0 = inlined_call_operand.vmem [shape: f32[16,8], index: 0, kind: input, shape index: {}]
  %s1 = inlined_call_operand.vmem [shape: f32[1,128], index: 1, kind: output, shape index: {}]
  $region1: #{tile.19} parent=0
    #allocation0 [shape = 'u8[4096]{0}', space=vmem, size = 0x1000, scoped, tag = 'scoped mem for output reshape']
    %v2 = vld [vmem:[%s0] sm:$0x1]
    %vm3 = vcmask 64512
    %4 = vst.msk [vmem:[#allocation0] sm:$0x1] %vm3, %v2
    %s5 = scalar_lea.vmem %s0, 15
    %v6 = vld [vmem:[%s5] sm:$0x1]
    %7 = vrot.lane.b32.xlu0 %v6, 120
    %v8 = vpop.permute.xlu0 %7
    %vm9 = vcmask 1048512
    %10 = vst.msk [vmem:[#allocation0] sm:$0x1] %vm9, %v8
    %s11 = scalar_lea.vmem %s0, 14
    %v12 = vld [vmem:[%s11] sm:$0x1]
    %13 = vrot.lane.b32.xlu0 %v12, 112
    %v14 = vpop.permute.xlu0 %13
    %vm15 = vcmask 982912
    %16 = vst.msk [vmem:[#allocation0] sm:$0x1] %vm15, %v14
    %s17 = scalar_lea.vmem %s0, 13
    %v18 = vld [vmem:[%s17] sm:$0x1]
    %19 = vrot.lane.b32.xlu0 %v18, 104
    %v20 = vpop.permute.xlu0 %19
    %vm21 = vcmask 917312
    %22 = vst.msk [vmem:[#allocation0] sm:$0x1] %vm21, %v20
    %s23 = scalar_lea.vmem %s0, 12
    %v24 = vld [vmem:[%s23] sm:$0x1]
    %25 = vrot.lane.b32.xlu0 %v24, 96
    %v26 = vpop.permute.xlu0 %25
    %vm27 = vcmask 851712
    %28 = vst.msk [vmem:[#allocation0] sm:$0x1] %vm27, %v26
    %s29 = scalar_lea.vmem %s0, 11
    %v30 = vld [vmem:[%s29] sm:$0x1]
    %31 = vrot.lane.b32.xlu0 %v30, 88
    %v32 = vpop.permute.xlu0 %31
    %vm33 = vcmask 786112
    %34 = vst.msk [vmem:[#allocation0] sm:$0x1] %vm33, %v32
    %s35 = scalar_lea.vmem %s0, 10
    %v36 = vld [vmem:[%s35] sm:$0x1]
    %37 = vrot.lane.b32.xlu0 %v36, 80
    %v38 = vpop.permute.xlu0 %37
    %vm39 = vcmask 720512
    %40 = vst.msk [vmem:[#allocation0] sm:$0x1] %vm39, %v38
    %s41 = scalar_lea.vmem %s0, 9
    %v42 = vld [vmem:[%s41] sm:$0x1]
    %43 = vrot.lane.b32.xlu0 %v42, 72
    %v44 = vpop.permute.xlu0 %43
    %vm45 = vcmask 654912
    %46 = vst.msk [vmem:[#allocation0] sm:$0x1] %vm45, %v44
    %s47 = scalar_lea.vmem %s0, 8
    %v48 = vld [vmem:[%s47] sm:$0x1]
    %49 = vrot.lane.b32.xlu0 %v48, 64
    %v50 = vpop.permute.xlu0 %49
    %vm51 = vcmask 589312
    %52 = vst.msk [vmem:[#allocation0] sm:$0x1] %vm51, %v50
    %s53 = scalar_lea.vmem %s0, 7
    %v54 = vld [vmem:[%s53] sm:$0x1]
    %55 = vrot.lane.b32.xlu0 %v54, 56
    %v56 = vpop.permute.xlu0 %55
    %vm57 = vcmask 523712
    %58 = vst.msk [vmem:[#allocation0] sm:$0x1] %vm57, %v56
    %s59 = scalar_lea.vmem %s0, 6
    %v60 = vld [vmem:[%s59] sm:$0x1]
    %61 = vrot.lane.b32.xlu0 %v60, 48
    %v62 = vpop.permute.xlu0 %61
    %vm63 = vcmask 458112
    %64 = vst.msk [vmem:[#allocation0] sm:$0x1] %vm63, %v62
    %s65 = scalar_lea.vmem %s0, 5
    %v66 = vld [vmem:[%s65] sm:$0x1]
    %67 = vrot.lane.b32.xlu0 %v66, 40
    %v68 = vpop.permute.xlu0 %67
    %vm69 = vcmask 392512
    %70 = vst.msk [vmem:[#allocation0] sm:$0x1] %vm69, %v68
    %s71 = scalar_lea.vmem %s0, 4
    %v72 = vld [vmem:[%s71] sm:$0x1]
    %73 = vrot.lane.b32.xlu0 %v72, 32
    %v74 = vpop.permute.xlu0 %73
    %vm75 = vcmask 326912
    %76 = vst.msk [vmem:[#allocation0] sm:$0x1] %vm75, %v74
    %s77 = scalar_lea.vmem %s0, 3
    %v78 = vld [vmem:[%s77] sm:$0x1]
    %79 = vrot.lane.b32.xlu0 %v78, 24
    %v80 = vpop.permute.xlu0 %79
    %vm81 = vcmask 261312
    %82 = vst.msk [vmem:[#allocation0] sm:$0x1] %vm81, %v80
    %s83 = scalar_lea.vmem %s0, 2
    %v84 = vld [vmem:[%s83] sm:$0x1]
    %85 = vrot.lane.b32.xlu0 %v84, 16
    %v86 = vpop.permute.xlu0 %85
    %vm87 = vcmask 195712
    %88 = vst.msk [vmem:[#allocation0] sm:$0x1] %vm87, %v86
    %s89 = scalar_lea.vmem %s0, 1
    %v90 = vld [vmem:[%s89] sm:$0x1]
    %91 = vrot.lane.b32.xlu0 %v90, 8
    %v92 = vpop.permute.xlu0 %91
    %vm93 = vcmask 130112
    %94 = vst.msk [vmem:[#allocation0] sm:$0x1] %vm93, %v92
    %s96 = sshll.u32 1, 1
    %s97 = ssub.s32 %s96, 1
    %v99 = vld [vmem:[#allocation0] sm:%s97]
    %s100 = sshll.u32 1, 1
    %s101 = ssub.s32 %s100, 1
    %102 = vst [vmem:[%s1] sm:%s101] %v99

// kernel: msag_forward.1
$region0: #{msag_forward.1}
  #allocation0 [shape = 'u32[]', space=smem, size = 0x4, offset = 0x4, fixed_abs, tag = 'smem constant byte address 0x4 - core index']
  #allocation1 [shape = 'u32[144,128]{1,0:T(1,128)}', space=vmem, size = 0x12000, scoped, tag = 'internal scratch']
  %s0 = inlined_call_operand.vmem [shape: bf16[2,22,88], index: 0, kind: input, shape index: {}]
  %s1 = inlined_call_operand.vmem [shape: bf16[3,88,128], index: 1, kind: input, shape index: {}]
  %s2 = inlined_call_operand.vmem [shape: bf16[5,88,128], index: 2, kind: input, shape index: {}]
  %s3 = inlined_call_operand.vmem [shape: bf16[7,88,128], index: 3, kind: input, shape index: {}]
  %s4 = inlined_call_operand.vmem [shape: f32[1,128], index: 4, kind: input, shape index: {}]
  %s5 = inlined_call_operand.vmem [shape: f32[1,128], index: 5, kind: input, shape index: {}]
  %s6 = inlined_call_operand.vmem [shape: f32[1,128], index: 6, kind: input, shape index: {}]
  %s7 = inlined_call_operand.vmem [shape: f32[2,16,128], index: 7, kind: output, shape index: {0}]
  %s8 = inlined_call_operand.vmem [shape: f32[2,16,128], index: 8, kind: output, shape index: {1}]
  %s9 = inlined_call_operand.vmem [shape: f32[2,16,128], index: 9, kind: output, shape index: {2}]
  %10 = xla_tuple %s7, %s8, %s9
  %s11 = sld [smem:[#allocation0]]
  $region77: #{msag_forward.1} parent=0
    _
  %s13 = ssub.s32 1, %s11
  %s14 = scalar_select 0, %s13, %s11
  loop: start=0, step=1, limit=4
  $region2: #{msag_forward.1} parent=0 // loop_pre_header
    _
  $region3: #{msag_forward.1} parent=0 // loop_header
    %s16 = sphi 0, %s20
    %p17 = scmp.ge.s32.totalorder %s16, 4
    %s26 = sphi 0, %s28
    %s29 = sphi 0, %s26
    %s30 = sphi 0, %s29
    %s46 = sphi 0, %s30
    %s50 = sphi 0, %s50
    %s52 = sphi 0, %s50
    %s53 = sphi 0, %s52
    %s67 = sphi 0, %s53
    %s71 = sphi 0, %s71
    %s73 = sphi 0, %s71
    %s74 = sphi 0, %s73
    %s88 = sphi 0, %s74
    %s92 = sphi 0, %s92
    %s94 = sphi 0, %s92
    %s95 = sphi 0, %s94
    %s109 = sphi 0, %s95
    %s113 = sphi 0, %s113
    %s115 = sphi 0, %s113
    %s116 = sphi 0, %s115
    %s130 = sphi 0, %s116
    %s134 = sphi 0, %s134
    %s136 = sphi 0, %s134
    %s137 = sphi 0, %s136
    %s151 = sphi 0, %s137
    %s155 = sphi 0, %s155
    %s157 = sphi 0, %s155
    %s158 = sphi 0, %s157
    %s172 = sphi 0, %s158
    %s178 = sphi 0, %s180
    %s181 = sphi 0, %s178
    %s182 = sphi 0, %s181
    %s198 = sphi 0, %s182
    %s204 = sphi 0, %s206
    %s207 = sphi 0, %s204
    %s208 = sphi 0, %s207
    %s224 = sphi 0, %s208
    %s230 = sphi 0, %s232
    %s233 = sphi 0, %s230
    %s234 = sphi 0, %s233
    %s250 = sphi 0, %s234
  $region4: #{msag_forward.1} parent=0 // loop_header_branch
    %19 = sbr.rel (%p17) target = $region8
  $region5: #{msag_forward.1} parent=0 // loop_body
    %s21 = ssub.s32 %s16, 1
    %s22 = ssub.s32 %s16, 2
    %s23 = sadd.s32 %s16, 1
    %s24 = ssub.s32 %s16, %s23
    %p25 = scmp.eq.s32.totalorder %s24, 0
    %s27 = sadd.s32 %s26, 1
    %s28 = scalar_select %p25, %s26, %s27
    %p31 = pneg %p25
    %p32 = scmp.eq.s32.totalorder %s16, 1
    %p33 = por %p31, %p32
    %p34 = scmp.ne.s32.totalorder %s26, %s29
    %p35 = scmp.eq.s32.totalorder %s16, 0
    %p36 = por %p34, %p35
    %p37 = scmp.ne.s32.totalorder %s26, %s29
    %p38 = scmp.eq.s32.totalorder %s21, 1
    %p39 = por %p37, %p38
    %p40 = scmp.ne.s32.totalorder %s29, %s30
    %p41 = scmp.eq.s32.totalorder %s21, 0
    %p42 = por %p40, %p41
    %p43 = scmp.ne.s32.totalorder %s29, %s30
    %p44 = scmp.eq.s32.totalorder %s22, 1
    %p45 = por %p43, %p44
    %p47 = scmp.ne.s32.totalorder %s30, %s46
    %p48 = scmp.eq.s32.totalorder %s22, 0
    %p49 = por %p47, %p48
    %s51 = sadd.s32 %s50, 1
    %p54 = scmp.eq.s32.totalorder %s16, 1
    %p55 = scmp.ne.s32.totalorder %s50, %s52
    %p56 = scmp.eq.s32.totalorder %s16, 0
    %p57 = por %p55, %p56
    %p58 = scmp.ne.s32.totalorder %s50, %s52
    %p59 = scmp.eq.s32.totalorder %s21, 1
    %p60 = por %p58, %p59
    %p61 = scmp.ne.s32.totalorder %s52, %s53
    %p62 = scmp.eq.s32.totalorder %s21, 0
    %p63 = por %p61, %p62
    %p64 = scmp.ne.s32.totalorder %s52, %s53
    %p65 = scmp.eq.s32.totalorder %s22, 1
    %p66 = por %p64, %p65
    %p68 = scmp.ne.s32.totalorder %s53, %s67
    %p69 = scmp.eq.s32.totalorder %s22, 0
    %p70 = por %p68, %p69
    %s72 = sadd.s32 %s71, 1
    %p75 = scmp.eq.s32.totalorder %s16, 1
    %p76 = scmp.ne.s32.totalorder %s71, %s73
    %p77 = scmp.eq.s32.totalorder %s16, 0
    %p78 = por %p76, %p77
    %p79 = scmp.ne.s32.totalorder %s71, %s73
    %p80 = scmp.eq.s32.totalorder %s21, 1
    %p81 = por %p79, %p80
    %p82 = scmp.ne.s32.totalorder %s73, %s74
    %p83 = scmp.eq.s32.totalorder %s21, 0
    %p84 = por %p82, %p83
    %p85 = scmp.ne.s32.totalorder %s73, %s74
    %p86 = scmp.eq.s32.totalorder %s22, 1
    %p87 = por %p85, %p86
    %p89 = scmp.ne.s32.totalorder %s74, %s88
    %p90 = scmp.eq.s32.totalorder %s22, 0
    %p91 = por %p89, %p90
    %s93 = sadd.s32 %s92, 1
    %p96 = scmp.eq.s32.totalorder %s16, 1
    %p97 = scmp.ne.s32.totalorder %s92, %s94
    %p98 = scmp.eq.s32.totalorder %s16, 0
    %p99 = por %p97, %p98
    %p100 = scmp.ne.s32.totalorder %s92, %s94
    %p101 = scmp.eq.s32.totalorder %s21, 1
    %p102 = por %p100, %p101
    %p103 = scmp.ne.s32.totalorder %s94, %s95
    %p104 = scmp.eq.s32.totalorder %s21, 0
    %p105 = por %p103, %p104
    %p106 = scmp.ne.s32.totalorder %s94, %s95
    %p107 = scmp.eq.s32.totalorder %s22, 1
    %p108 = por %p106, %p107
    %p110 = scmp.ne.s32.totalorder %s95, %s109
    %p111 = scmp.eq.s32.totalorder %s22, 0
    %p112 = por %p110, %p111
    %s114 = sadd.s32 %s113, 1
    %p117 = scmp.eq.s32.totalorder %s16, 1
    %p118 = scmp.ne.s32.totalorder %s113, %s115
    %p119 = scmp.eq.s32.totalorder %s16, 0
    %p120 = por %p118, %p119
    %p121 = scmp.ne.s32.totalorder %s113, %s115
    %p122 = scmp.eq.s32.totalorder %s21, 1
    %p123 = por %p121, %p122
    %p124 = scmp.ne.s32.totalorder %s115, %s116
    %p125 = scmp.eq.s32.totalorder %s21, 0
    %p126 = por %p124, %p125
    %p127 = scmp.ne.s32.totalorder %s115, %s116
    %p128 = scmp.eq.s32.totalorder %s22, 1
    %p129 = por %p127, %p128
    %p131 = scmp.ne.s32.totalorder %s116, %s130
    %p132 = scmp.eq.s32.totalorder %s22, 0
    %p133 = por %p131, %p132
    %s135 = sadd.s32 %s134, 1
    %p138 = scmp.eq.s32.totalorder %s16, 1
    %p139 = scmp.ne.s32.totalorder %s134, %s136
    %p140 = scmp.eq.s32.totalorder %s16, 0
    %p141 = por %p139, %p140
    %p142 = scmp.ne.s32.totalorder %s134, %s136
    %p143 = scmp.eq.s32.totalorder %s21, 1
    %p144 = por %p142, %p143
    %p145 = scmp.ne.s32.totalorder %s136, %s137
    %p146 = scmp.eq.s32.totalorder %s21, 0
    %p147 = por %p145, %p146
    %p148 = scmp.ne.s32.totalorder %s136, %s137
    %p149 = scmp.eq.s32.totalorder %s22, 1
    %p150 = por %p148, %p149
    %p152 = scmp.ne.s32.totalorder %s137, %s151
    %p153 = scmp.eq.s32.totalorder %s22, 0
    %p154 = por %p152, %p153
    %s156 = sadd.s32 %s155, 1
    %p159 = scmp.eq.s32.totalorder %s16, 1
    %p160 = scmp.ne.s32.totalorder %s155, %s157
    %p161 = scmp.eq.s32.totalorder %s16, 0
    %p162 = por %p160, %p161
    %p163 = scmp.ne.s32.totalorder %s155, %s157
    %p164 = scmp.eq.s32.totalorder %s21, 1
    %p165 = por %p163, %p164
    %p166 = scmp.ne.s32.totalorder %s157, %s158
    %p167 = scmp.eq.s32.totalorder %s21, 0
    %p168 = por %p166, %p167
    %p169 = scmp.ne.s32.totalorder %s157, %s158
    %p170 = scmp.eq.s32.totalorder %s22, 1
    %p171 = por %p169, %p170
    %p173 = scmp.ne.s32.totalorder %s158, %s172
    %p174 = scmp.eq.s32.totalorder %s22, 0
    %p175 = por %p173, %p174
    %s176 = ssub.s32 %s16, %s23
    %p177 = scmp.eq.s32.totalorder %s176, 0
    %s179 = sadd.s32 %s178, 1
    %s180 = scalar_select %p177, %s178, %s179
    %p183 = pneg %p177
    %p184 = scmp.eq.s32.totalorder %s16, 1
    %p185 = por %p183, %p184
    %p186 = scmp.ne.s32.totalorder %s178, %s181
    %p187 = scmp.eq.s32.totalorder %s16, 0
    %p188 = por %p186, %p187
    %p189 = scmp.ne.s32.totalorder %s178, %s181
    %p190 = scmp.eq.s32.totalorder %s21, 1
    %p191 = por %p189, %p190
    %p192 = scmp.ne.s32.totalorder %s181, %s182
    %p193 = scmp.eq.s32.totalorder %s21, 0
    %p194 = por %p192, %p193
    %p195 = scmp.ne.s32.totalorder %s181, %s182
    %p196 = scmp.eq.s32.totalorder %s22, 1
    %p197 = por %p195, %p196
    %p199 = scmp.ne.s32.totalorder %s182, %s198
    %p200 = scmp.eq.s32.totalorder %s22, 0
    %p201 = por %p199, %p200
    %s202 = ssub.s32 %s16, %s23
    %p203 = scmp.eq.s32.totalorder %s202, 0
    %s205 = sadd.s32 %s204, 1
    %s206 = scalar_select %p203, %s204, %s205
    %p209 = pneg %p203
    %p210 = scmp.eq.s32.totalorder %s16, 1
    %p211 = por %p209, %p210
    %p212 = scmp.ne.s32.totalorder %s204, %s207
    %p213 = scmp.eq.s32.totalorder %s16, 0
    %p214 = por %p212, %p213
    %p215 = scmp.ne.s32.totalorder %s204, %s207
    %p216 = scmp.eq.s32.totalorder %s21, 1
    %p217 = por %p215, %p216
    %p218 = scmp.ne.s32.totalorder %s207, %s208
    %p219 = scmp.eq.s32.totalorder %s21, 0
    %p220 = por %p218, %p219
    %p221 = scmp.ne.s32.totalorder %s207, %s208
    %p222 = scmp.eq.s32.totalorder %s22, 1
    %p223 = por %p221, %p222
    %p225 = scmp.ne.s32.totalorder %s208, %s224
    %p226 = scmp.eq.s32.totalorder %s22, 0
    %p227 = por %p225, %p226
    %s228 = ssub.s32 %s16, %s23
    %p229 = scmp.eq.s32.totalorder %s228, 0
    %s231 = sadd.s32 %s230, 1
    %s232 = scalar_select %p229, %s230, %s231
    %p235 = pneg %p229
    %p236 = scmp.eq.s32.totalorder %s16, 1
    %p237 = por %p235, %p236
    %p238 = scmp.ne.s32.totalorder %s230, %s233
    %p239 = scmp.eq.s32.totalorder %s16, 0
    %p240 = por %p238, %p239
    %p241 = scmp.ne.s32.totalorder %s230, %s233
    %p242 = scmp.eq.s32.totalorder %s21, 1
    %p243 = por %p241, %p242
    %p244 = scmp.ne.s32.totalorder %s233, %s234
    %p245 = scmp.eq.s32.totalorder %s21, 0
    %p246 = por %p244, %p245
    %p247 = scmp.ne.s32.totalorder %s233, %s234
    %p248 = scmp.eq.s32.totalorder %s22, 1
    %p249 = por %p247, %p248
    %p251 = scmp.ne.s32.totalorder %s234, %s250
    %p252 = scmp.eq.s32.totalorder %s22, 0
    %p253 = por %p251, %p252
    %p254 = scmp.le.s32.totalorder 1, %s16
    %p255 = scmp.lt.s32.totalorder %s16, 3
    %p256 = pnand %p254, %p255
    %p257 = pneg %p256
    // Predicated region
    $region9: #{msag_forward.1} parent=5 // pred_check
      _
    $region10: #{msag_forward.1} parent=5 // pred_check_branch
      %259 = sbr.rel (%p256) target = $region12
    $region11: #{msag_forward.1} parent=5 // pred_region
      %s260 = ssub.s32 %s16, 1
      // Predicated region
      $region13: #{msag_forward.1} parent=11 // pred_check
        %p261 = pneg %p63
      $region14: #{msag_forward.1} parent=11 // pred_check_branch
        %263 = sbr.rel (%p261) target = $region16
      $region15: #{msag_forward.1} parent=11 // pred_region
        _
      $region16: #{msag_forward.1} parent=11 // pred_fallthru
        _
      // Predicated region
      $region17: #{msag_forward.1} parent=11 // pred_check
        %p264 = pneg %p84
      $region18: #{msag_forward.1} parent=11 // pred_check_branch
        %266 = sbr.rel (%p264) target = $region20
      $region19: #{msag_forward.1} parent=11 // pred_region
        _
      $region20: #{msag_forward.1} parent=11 // pred_fallthru
        _
      // Predicated region
      $region21: #{msag_forward.1} parent=11 // pred_check
        %p267 = pneg %p105
      $region22: #{msag_forward.1} parent=11 // pred_check_branch
        %269 = sbr.rel (%p267) target = $region24
      $region23: #{msag_forward.1} parent=11 // pred_region
        _
      $region24: #{msag_forward.1} parent=11 // pred_fallthru
        _
      // Predicated region
      $region25: #{msag_forward.1} parent=11 // pred_check
        %p270 = pneg %p126
      $region26: #{msag_forward.1} parent=11 // pred_check_branch
        %272 = sbr.rel (%p270) target = $region28
      $region27: #{msag_forward.1} parent=11 // pred_region
        _
      $region28: #{msag_forward.1} parent=11 // pred_fallthru
        _
      // Predicated region
      $region29: #{msag_forward.1} parent=11 // pred_check
        %p273 = pneg %p147
      $region30: #{msag_forward.1} parent=11 // pred_check_branch
        %275 = sbr.rel (%p273) target = $region32
      $region31: #{msag_forward.1} parent=11 // pred_region
        _
      $region32: #{msag_forward.1} parent=11 // pred_fallthru
        _
      // Predicated region
      $region33: #{msag_forward.1} parent=11 // pred_check
        %p276 = pneg %p168
      $region34: #{msag_forward.1} parent=11 // pred_check_branch
        %278 = sbr.rel (%p276) target = $region36
      $region35: #{msag_forward.1} parent=11 // pred_region
        _
      $region36: #{msag_forward.1} parent=11 // pred_fallthru
        _
    $region12: #{msag_forward.1} parent=5 // pred_fallthru
      _
    %p279 = scmp.lt.s32.totalorder %s16, 2
    // Predicated region
    $region37: #{msag_forward.1} parent=5 // pred_check
      %p280 = pneg %p279
    $region38: #{msag_forward.1} parent=5 // pred_check_branch
      %282 = sbr.rel (%p280) target = $region40
    $region39: #{msag_forward.1} parent=5 // pred_region
      // Predicated region
      $region41: #{msag_forward.1} parent=39 // pred_check
        %p283 = pneg %p36
      $region42: #{msag_forward.1} parent=39 // pred_check_branch
        %285 = sbr.rel (%p283) target = $region44
      $region43: #{msag_forward.1} parent=39 // pred_region
        %p286 = scmp.lt.s32.totalorder %s16, 1
        %s287 = scalar_select %p286, %s16, 1
        %s288 = smul.addr %s287, 3
        %s289 = smul.addr %s288, 4
        %s290 = scalar_lea.vmem %s0, %s289
      $region44: #{msag_forward.1} parent=39 // pred_fallthru
        _
    $region40: #{msag_forward.1} parent=5 // pred_fallthru
      _
    %p291 = scmp.le.s32.totalorder 1, %s16
    %p292 = scmp.lt.s32.totalorder %s16, 3
    %p293 = pnand %p291, %p292
    %p294 = pneg %p293
    // Predicated region
    $region45: #{msag_forward.1} parent=5 // pred_check
      _
    $region46: #{msag_forward.1} parent=5 // pred_check_branch
      %296 = sbr.rel (%p293) target = $region48
    $region47: #{msag_forward.1} parent=5 // pred_region
      %s297 = ssub.s32 %s16, 1
      %p298 = scmp.lt.s32.totalorder %s21, 1
      %s299 = scalar_select %p298, %s21, 1
      %s300 = smul.addr %s299, 3
      %s301 = smul.addr %s300, 4
      %s302 = scalar_lea.vmem %s0, %s301
      %p303 = pneg %p42
      %p304 = pneg %p39
      %p305 = pneg %p63
      %p306 = pneg %p60
      %p307 = pneg %p84
      %p308 = pneg %p81
      %p309 = pneg %p105
      %p310 = pneg %p102
      %p311 = pneg %p126
      %p312 = pneg %p123
      %p313 = pneg %p147
      %p314 = pneg %p144
      %p315 = pneg %p168
      %p316 = pneg %p165
      %p317 = pneg %p194
      %p318 = pneg %p191
      %p319 = scmp.lt.s32.totalorder %s21, 1
      %s320 = scalar_select %p319, %s21, 1
      %s321 = smul.addr %s320, 2
      %s322 = smul.addr %s321, 8
      %s323 = scalar_lea.vmem %s7, %s322
      %p324 = pneg %p220
      %p325 = pneg %p217
      %p326 = scmp.lt.s32.totalorder %s21, 1
      %s327 = scalar_select %p326, %s21, 1
      %s328 = smul.addr %s327, 2
      %s329 = smul.addr %s328, 8
      %s330 = scalar_lea.vmem %s8, %s329
      %p331 = pneg %p246
      %p332 = pneg %p243
      %p333 = scmp.lt.s32.totalorder %s21, 1
      %s334 = scalar_select %p333, %s21, 1
      %s335 = smul.addr %s334, 2
      %s336 = smul.addr %s335, 8
      %s337 = scalar_lea.vmem %s9, %s336
      %p338 = scmp.lt.s32.totalorder %s21, 1
      %s339 = scalar_select %p338, %s21, 1
      %s340 = smul.addr %s339, 3
      %s341 = smul.addr %s340, 4
      %s342 = scalar_lea.vmem %s0, %s341
      %p343 = scmp.lt.s32.totalorder %s21, 1
      %s344 = scalar_select %p343, %s21, 1
      %s345 = smul.addr %s344, 2
      %s346 = smul.addr %s345, 8
      %s347 = scalar_lea.vmem %s7, %s346
      %p348 = scmp.lt.s32.totalorder %s21, 1
      %s349 = scalar_select %p348, %s21, 1
      %s350 = smul.addr %s349, 2
      %s351 = smul.addr %s350, 8
      %s352 = scalar_lea.vmem %s8, %s351
      %p353 = scmp.lt.s32.totalorder %s21, 1
      %s354 = scalar_select %p353, %s21, 1
      %s355 = smul.addr %s354, 2
      %s356 = smul.addr %s355, 8
      %s357 = scalar_lea.vmem %s9, %s356
      %v359 = vld [vmem:[%s4] sm:$0x1]
      %v361 = vlaneseq
      %v362 = vshrl.u32 %v361, 7
      %v363 = vsub.s32 0, %v362
      %v364 = vrot.slane %v359, %v363
      %v366 = vld [vmem:[%s342] sm:$0xe]
      %v367 = vld [vmem:[%s342 + $0x4] sm:$0xf]
      %v368 = vld [vmem:[%s342 + $0x8] sm:$0x1]
      %v369 = vld [vmem:[%s1] sm:$0xf]
      %v370 = vld [vmem:[%s1 + $0x4] sm:$0xf]
      %v371 = vld [vmem:[%s1 + $0x8] sm:$0xf]
      %v372 = vld [vmem:[%s1 + $0xc] sm:$0xf]
      %v373 = vld [vmem:[%s1 + $0x10] sm:$0xf]
      %v374 = vld [vmem:[%s1 + $0x14] sm:$0xf]
      %v375 = vld [vmem:[%s1 + $0x18] sm:$0xf]
      %v376 = vld [vmem:[%s1 + $0x1c] sm:$0xf]
      %v377 = vld [vmem:[%s1 + $0x20] sm:$0xf]
      %v378 = vld [vmem:[%s1 + $0x24] sm:$0xf]
      %v379 = vld [vmem:[%s1 + $0x28] sm:$0xf]
      %v383 = vunpack.c.l.b16 %v366
      %v384 = vunpack.c.l.b16 %v367
      %v385 = vunpack.c.l.b16 %v368
      %v386 = vpack.c.b16 %v384, %v383
      %v387 = vpack.c.b16 %v385, %v385
      %vm388 = vcmask 1046528
      %v389 = vrot.slane %v386, 1
      %v390 = vrot.slane %v387, 1
      %v391 = vsel %vm388, %v389, %v390
      %v403 = vunpack.c.l.b16 %v369
      %v404 = vunpack.c.l.b16 %v370
      %v405 = vunpack.c.l.b16 %v371
      %v406 = vunpack.c.l.b16 %v372
      %v407 = vunpack.c.l.b16 %v373
      %v408 = vunpack.c.l.b16 %v374
      %v409 = vunpack.c.l.b16 %v375
      %v410 = vunpack.c.l.b16 %v376
      %v411 = vunpack.c.l.b16 %v377
      %v412 = vunpack.c.l.b16 %v378
      %v413 = vunpack.c.l.b16 %v379
      %v414 = vpack.c.b16 %v404, %v403
      %v415 = vpack.c.b16 %v406, %v405
      %v416 = vpack.c.b16 %v408, %v407
      %v417 = vpack.c.b16 %v410, %v409
      %v418 = vpack.c.b16 %v412, %v411
      %v419 = vpack.c.b16 %v413, %v413
      %vm425 = vcmask 719872
      %v427 = vsel %vm425, %v391, 0
      %vm429 = vcmask 1043456
      %v431 = vsel %vm429, %v419, 0
      %433 = vmatprep.subr.bf16.mxu0 0
      %434 = vmatpush1.bf16.msra.mxu0 0
      %435 = vmatprep.subr.bf16.mxu0 0
      %436 = vmatpush1.bf16.msra.mxu0 0
      %437 = vmatprep.subr.bf16.mxu0 0
      %438 = vmatpush1.bf16.msra.mxu0 %v431
      %439 = vmatprep.subr.bf16.mxu0 0
      %440 = vmatpush1.bf16.msra.mxu0 %v418
      %441 = vmatprep.subr.bf16.mxu0 0
      %442 = vmatpush1.bf16.msra.mxu0 %v417
      %443 = vmatprep.subr.bf16.mxu0 0
      %444 = vmatpush1.bf16.msra.mxu0 %v416
      %445 = vmatprep.subr.bf16.mxu0 0
      %446 = vmatpush1.bf16.msra.mxu0 %v415
      %447 = vmatprep.subr.bf16.mxu0 0
      %448 = vmatpush1.bf16.msra.mxu0 %v414
      %449 = vmatprep.subr.bf16.mxu0 0
      %450 = vmatpush2.bf16.msra.mxu0 0
      %451 = vmatprep.subr.bf16.mxu0 0
      %452 = vmatpush2.bf16.msra.mxu0 0
      %453 = vmatprep.subr.bf16.mxu0 0
      %454 = vmatpush2.bf16.msra.mxu0 0
      %455 = vmatprep.subr.bf16.mxu0 0
      %456 = vmatpush2.bf16.msra.mxu0 0
      %457 = vmatprep.subr.bf16.mxu0 0
      %458 = vmatpush2.bf16.msra.mxu0 0
      %459 = vmatprep.subr.bf16.mxu0 0
      %460 = vmatpush2.bf16.msra.mxu0 0
      %461 = vmatprep.subr.bf16.mxu0 0
      %462 = vmatpush2.bf16.msra.mxu0 0
      %463 = vmatprep.subr.bf16.mxu0 0
      %464 = vmatpush2.bf16.msra.mxu0 0
      %465 = vmatprep.mubr.bf16.mxu0 0
      %466 = vmatmul.mubr.bf16.gmra.mxu0 %v427
      %v467 = vpop.f32.mrf.mxu0
      %v468 = vadd.f32 0.0, %v467
      %v469 = vpop.f32.mrf.mxu0
      %v470 = vpop.f32.mrf.mxu0
      %v471 = vadd.f32 0.0, %v470
      %v472 = vpop.f32.mrf.mxu0
      %473 = vdwg.mxu0
      %v474 = vadd.f32 %v364, %v468
      %v475 = vadd.f32 %v364, %v471
      %v476 = vld [vmem:[%s342 + $0x8] sm:$0x3]
      %s477 = scalar_lea.vmem %s1, 44
      %v478 = vld [vmem:[%s477] sm:$0xf]
      %v479 = vld [vmem:[%s477 + $0x4] sm:$0xf]
      %v480 = vld [vmem:[%s477 + $0x8] sm:$0xf]
      %v481 = vld [vmem:[%s477 + $0xc] sm:$0xf]
      %v482 = vld [vmem:[%s477 + $0x10] sm:$0xf]
      %v483 = vld [vmem:[%s477 + $0x14] sm:$0xf]
      %v484 = vld [vmem:[%s477 + $0x18] sm:$0xf]
      %v485 = vld [vmem:[%s477 + $0x1c] sm:$0xf]
      %v486 = vld [vmem:[%s477 + $0x20] sm:$0xf]
      %v487 = vld [vmem:[%s477 + $0x24] sm:$0xf]
      %v488 = vld [vmem:[%s477 + $0x28] sm:$0xf]
      %v490 = vunpack.c.l.b16 %v476
      %v491 = vpack.c.b16 %v490, %v490
      %vm492 = vsmask.f32 6400
      %v494 = vshrl.u32 %v386, 16
      %v496 = vrot.slane %v494, 1
      %v497 = vshll.u32 %v386, 16
      %v499 = vrot.slane %v497, 2
      %v500 = vor.u32 %v496, %v499
      %v502 = vshrl.u32 %v491, 16
      %v504 = vrot.slane %v502, 1
      %v505 = vshll.u32 %v491, 16
      %v507 = vrot.slane %v505, 2
      %v508 = vor.u32 %v504, %v507
      %v509 = vsel %vm492, %v500, %v508
      %v521 = vunpack.c.l.b16 %v478
      %v522 = vunpack.c.l.b16 %v479
      %v523 = vunpack.c.l.b16 %v480
      %v524 = vunpack.c.l.b16 %v481
      %v525 = vunpack.c.l.b16 %v482
      %v526 = vunpack.c.l.b16 %v483
      %v527 = vunpack.c.l.b16 %v484
      %v528 = vunpack.c.l.b16 %v485
      %v529 = vunpack.c.l.b16 %v486
      %v530 = vunpack.c.l.b16 %v487
      %v531 = vunpack.c.l.b16 %v488
      %v532 = vpack.c.b16 %v522, %v521
      %v533 = vpack.c.b16 %v524, %v523
      %v534 = vpack.c.b16 %v526, %v525
      %v535 = vpack.c.b16 %v528, %v527
      %v536 = vpack.c.b16 %v530, %v529
      %v537 = vpack.c.b16 %v531, %v531
      %v544 = vsel %vm425, %v509, 0
      %v547 = vsel %vm429, %v537, 0
      %549 = vmatprep.subr.bf16.mxu0 0
      %550 = vmatpush1.bf16.msra.mxu0 0
      %551 = vmatprep.subr.bf16.mxu0 0
      %552 = vmatpush1.bf16.msra.mxu0 0
      %553 = vmatprep.subr.bf16.mxu0 0
      %554 = vmatpush1.bf16.msra.mxu0 %v547
      %555 = vmatprep.subr.bf16.mxu0 0
      %556 = vmatpush1.bf16.msra.mxu0 %v536
      %557 = vmatprep.subr.bf16.mxu0 0
      %558 = vmatpush1.bf16.msra.mxu0 %v535
      %559 = vmatprep.subr.bf16.mxu0 0
      %560 = vmatpush1.bf16.msra.mxu0 %v534
      %561 = vmatprep.subr.bf16.mxu0 0
      %562 = vmatpush1.bf16.msra.mxu0 %v533
      %563 = vmatprep.subr.bf16.mxu0 0
      %564 = vmatpush1.bf16.msra.mxu0 %v532
      %565 = vmatprep.subr.bf16.mxu0 0
      %566 = vmatpush2.bf16.msra.mxu0 0
      %567 = vmatprep.subr.bf16.mxu0 0
      %568 = vmatpush2.bf16.msra.mxu0 0
      %569 = vmatprep.subr.bf16.mxu0 0
      %570 = vmatpush2.bf16.msra.mxu0 0
      %571 = vmatprep.subr.bf16.mxu0 0
      %572 = vmatpush2.bf16.msra.mxu0 0
      %573 = vmatprep.subr.bf16.mxu0 0
      %574 = vmatpush2.bf16.msra.mxu0 0
      %575 = vmatprep.subr.bf16.mxu0 0
      %576 = vmatpush2.bf16.msra.mxu0 0
      %577 = vmatprep.subr.bf16.mxu0 0
      %578 = vmatpush2.bf16.msra.mxu0 0
      %579 = vmatprep.subr.bf16.mxu0 0
      %580 = vmatpush2.bf16.msra.mxu0 0
      %581 = vmatprep.mubr.bf16.mxu0 0
      %582 = vmatmul.mubr.bf16.gmra.mxu0 %v544
      %v583 = vpop.f32.mrf.mxu0
      %v584 = vadd.f32 0.0, %v583
      %v585 = vpop.f32.mrf.mxu0
      %v586 = vpop.f32.mrf.mxu0
      %v587 = vadd.f32 0.0, %v586
      %v588 = vpop.f32.mrf.mxu0
      %589 = vdwg.mxu0
      %v590 = vadd.f32 %v474, %v584
      %v591 = vadd.f32 %v475, %v587
      %v592 = vld [vmem:[%s342] sm:$0xc]
      %s593 = scalar_lea.vmem %s1, 88
      %v594 = vld [vmem:[%s593] sm:$0xf]
      %v595 = vld [vmem:[%s593 + $0x4] sm:$0xf]
      %v596 = vld [vmem:[%s593 + $0x8] sm:$0xf]
      %v597 = vld [vmem:[%s593 + $0xc] sm:$0xf]
      %v598 = vld [vmem:[%s593 + $0x10] sm:$0xf]
      %v599 = vld [vmem:[%s593 + $0x14] sm:$0xf]
      %v600 = vld [vmem:[%s593 + $0x18] sm:$0xf]
      %v601 = vld [vmem:[%s593 + $0x1c] sm:$0xf]
      %v602 = vld [vmem:[%s593 + $0x20] sm:$0xf]
      %v603 = vld [vmem:[%s593 + $0x24] sm:$0xf]
      %v604 = vld [vmem:[%s593 + $0x28] sm:$0xf]
      %v606 = vunpack.c.l.b16 %v592
      %v607 = vpack.c.b16 %v384, %v606
      %vm608 = vcmask 1045504
      %v609 = vrot.slane %v607, 2
      %v610 = vrot.slane %v491, 2
      %v611 = vsel %vm608, %v609, %v610
      %v623 = vunpack.c.l.b16 %v594
      %v624 = vunpack.c.l.b16 %v595
      %v625 = vunpack.c.l.b16 %v596
      %v626 = vunpack.c.l.b16 %v597
      %v627 = vunpack.c.l.b16 %v598
      %v628 = vunpack.c.l.b16 %v599
      %v629 = vunpack.c.l.b16 %v600
      %v630 = vunpack.c.l.b16 %v601
      %v631 = vunpack.c.l.b16 %v602
      %v632 = vunpack.c.l.b16 %v603
      %v633 = vunpack.c.l.b16 %v604
      %v634 = vpack.c.b16 %v624, %v623
      %v635 = vpack.c.b16 %v626, %v625
      %v636 = vpack.c.b16 %v628, %v627
      %v637 = vpack.c.b16 %v630, %v629
      %v638 = vpack.c.b16 %v632, %v631
      %v639 = vpack.c.b16 %v633, %v633
      %v646 = vsel %vm425, %v611, 0
      %v649 = vsel %vm429, %v639, 0
      %651 = vmatprep.subr.bf16.mxu0 0
      %652 = vmatpush1.bf16.msra.mxu0 0
      %653 = vmatprep.subr.bf16.mxu0 0
      %654 = vmatpush1.bf16.msra.mxu0 0
      %655 = vmatprep.subr.bf16.mxu0 0
      %656 = vmatpush1.bf16.msra.mxu0 %v649
      %657 = vmatprep.subr.bf16.mxu0 0
      %658 = vmatpush1.bf16.msra.mxu0 %v638
      %659 = vmatprep.subr.bf16.mxu0 0
      %660 = vmatpush1.bf16.msra.mxu0 %v637
      %661 = vmatprep.subr.bf16.mxu0 0
      %662 = vmatpush1.bf16.msra.mxu0 %v636
      %663 = vmatprep.subr.bf16.mxu0 0
      %664 = vmatpush1.bf16.msra.mxu0 %v635
      %665 = vmatprep.subr.bf16.mxu0 0
      %666 = vmatpush1.bf16.msra.mxu0 %v634
      %667 = vmatprep.subr.bf16.mxu0 0
      %668 = vmatpush2.bf16.msra.mxu0 0
      %669 = vmatprep.subr.bf16.mxu0 0
      %670 = vmatpush2.bf16.msra.mxu0 0
      %671 = vmatprep.subr.bf16.mxu0 0
      %672 = vmatpush2.bf16.msra.mxu0 0
      %673 = vmatprep.subr.bf16.mxu0 0
      %674 = vmatpush2.bf16.msra.mxu0 0
      %675 = vmatprep.subr.bf16.mxu0 0
      %676 = vmatpush2.bf16.msra.mxu0 0
      %677 = vmatprep.subr.bf16.mxu0 0
      %678 = vmatpush2.bf16.msra.mxu0 0
      %679 = vmatprep.subr.bf16.mxu0 0
      %680 = vmatpush2.bf16.msra.mxu0 0
      %681 = vmatprep.subr.bf16.mxu0 0
      %682 = vmatpush2.bf16.msra.mxu0 0
      %683 = vmatprep.mubr.bf16.mxu0 0
      %684 = vmatmul.mubr.bf16.gmra.mxu0 %v646
      %v685 = vpop.f32.mrf.mxu0
      %v686 = vadd.f32 0.0, %v685
      %v687 = vpop.f32.mrf.mxu0
      %v688 = vpop.f32.mrf.mxu0
      %v689 = vadd.f32 0.0, %v688
      %v690 = vpop.f32.mrf.mxu0
      %691 = vdwg.mxu0
      %v692 = vadd.f32 %v590, %v686
      %v693 = vadd.f32 %v591, %v689
      %v694 = vmax.f32 %v692, 0.0
      %v695 = vmax.f32 %v693, 0.0
      %696 = vst [vmem:[%s347] sm:$0xff] %v694
      %697 = vst [vmem:[%s347 + $0x8] sm:$0xff] %v695
      %v698 = vld [vmem:[%s5] sm:$0x1]
      %v700 = vlaneseq
      %v701 = vshrl.u32 %v700, 7
      %v702 = vsub.s32 0, %v701
      %v703 = vrot.slane %v698, %v702
      %v705 = vld [vmem:[%s342] sm:$0xf]
      %v706 = vld [vmem:[%s342 + $0x4] sm:$0xf]
      %v707 = vld [vmem:[%s342 + $0x8] sm:$0x1]
      %v708 = vld [vmem:[%s2] sm:$0xf]
      %v709 = vld [vmem:[%s2 + $0x4] sm:$0xf]
      %v710 = vld [vmem:[%s2 + $0x8] sm:$0xf]
      %v711 = vld [vmem:[%s2 + $0xc] sm:$0xf]
      %v712 = vld [vmem:[%s2 + $0x10] sm:$0xf]
      %v713 = vld [vmem:[%s2 + $0x14] sm:$0xf]
      %v714 = vld [vmem:[%s2 + $0x18] sm:$0xf]
      %v715 = vld [vmem:[%s2 + $0x1c] sm:$0xf]
      %v716 = vld [vmem:[%s2 + $0x20] sm:$0xf]
      %v717 = vld [vmem:[%s2 + $0x24] sm:$0xf]
      %v718 = vld [vmem:[%s2 + $0x28] sm:$0xf]
      %v722 = vunpack.c.l.b16 %v705
      %v723 = vunpack.c.l.b16 %v706
      %v724 = vunpack.c.l.b16 %v707
      %v725 = vpack.c.b16 %v723, %v722
      %v726 = vpack.c.b16 %v724, %v724
      %vm727 = vsmask.f32 7424
      %v729 = vshrl.u32 %v725, 16
      %v731 = vshll.u32 %v725, 16
      %v733 = vrot.slane %v731, 1
      %v734 = vor.u32 %v729, %v733
      %v736 = vshll.u32 %v726, 16
      %v738 = vrot.slane %v736, 1
      %v739 = vsel %vm727, %v734, %v738
      %v751 = vunpack.c.l.b16 %v708
      %v752 = vunpack.c.l.b16 %v709
      %v753 = vunpack.c.l.b16 %v710
      %v754 = vunpack.c.l.b16 %v711
      %v755 = vunpack.c.l.b16 %v712
      %v756 = vunpack.c.l.b16 %v713
      %v757 = vunpack.c.l.b16 %v714
      %v758 = vunpack.c.l.b16 %v715
      %v759 = vunpack.c.l.b16 %v716
      %v760 = vunpack.c.l.b16 %v717
      %v761 = vunpack.c.l.b16 %v718
      %v762 = vpack.c.b16 %v752, %v751
      %v763 = vpack.c.b16 %v754, %v753
      %v764 = vpack.c.b16 %v756, %v755
      %v765 = vpack.c.b16 %v758, %v757
      %v766 = vpack.c.b16 %v760, %v759
      %v767 = vpack.c.b16 %v761, %v761
      %v774 = vsel %vm425, %v739, 0
      %v777 = vsel %vm429, %v767, 0
      %779 = vmatprep.subr.bf16.mxu0 0
      %780 = vmatpush1.bf16.msra.mxu0 0
      %781 = vmatprep.subr.bf16.mxu0 0
      %782 = vmatpush1.bf16.msra.mxu0 0
      %783 = vmatprep.subr.bf16.mxu0 0
      %784 = vmatpush1.bf16.msra.mxu0 %v777
      %785 = vmatprep.subr.bf16.mxu0 0
      %786 = vmatpush1.bf16.msra.mxu0 %v766
      %787 = vmatprep.subr.bf16.mxu0 0
      %788 = vmatpush1.bf16.msra.mxu0 %v765
      %789 = vmatprep.subr.bf16.mxu0 0
      %790 = vmatpush1.bf16.msra.mxu0 %v764
      %791 = vmatprep.subr.bf16.mxu0 0
      %792 = vmatpush1.bf16.msra.mxu0 %v763
      %793 = vmatprep.subr.bf16.mxu0 0
      %794 = vmatpush1.bf16.msra.mxu0 %v762
      %795 = vmatprep.subr.bf16.mxu0 0
      %796 = vmatpush2.bf16.msra.mxu0 0
      %797 = vmatprep.subr.bf16.mxu0 0
      %798 = vmatpush2.bf16.msra.mxu0 0
      %799 = vmatprep.subr.bf16.mxu0 0
      %800 = vmatpush2.bf16.msra.mxu0 0
      %801 = vmatprep.subr.bf16.mxu0 0
      %802 = vmatpush2.bf16.msra.mxu0 0
      %803 = vmatprep.subr.bf16.mxu0 0
      %804 = vmatpush2.bf16.msra.mxu0 0
      %805 = vmatprep.subr.bf16.mxu0 0
      %806 = vmatpush2.bf16.msra.mxu0 0
      %807 = vmatprep.subr.bf16.mxu0 0
      %808 = vmatpush2.bf16.msra.mxu0 0
      %809 = vmatprep.subr.bf16.mxu0 0
      %810 = vmatpush2.bf16.msra.mxu0 0
      %811 = vmatprep.mubr.bf16.mxu0 0
      %812 = vmatmul.mubr.bf16.gmra.mxu0 %v774
      %v813 = vpop.f32.mrf.mxu0
      %v814 = vadd.f32 0.0, %v813
      %v815 = vpop.f32.mrf.mxu0
      %v816 = vpop.f32.mrf.mxu0
      %v817 = vadd.f32 0.0, %v816
      %v818 = vpop.f32.mrf.mxu0
      %819 = vdwg.mxu0
      %v820 = vadd.f32 %v703, %v814
      %v821 = vadd.f32 %v703, %v817
      %v822 = vld [vmem:[%s342] sm:$0xe]
      %s823 = scalar_lea.vmem %s2, 44
      %v824 = vld [vmem:[%s823] sm:$0xf]
      %v825 = vld [vmem:[%s823 + $0x4] sm:$0xf]
      %v826 = vld [vmem:[%s823 + $0x8] sm:$0xf]
      %v827 = vld [vmem:[%s823 + $0xc] sm:$0xf]
      %v828 = vld [vmem:[%s823 + $0x10] sm:$0xf]
      %v829 = vld [vmem:[%s823 + $0x14] sm:$0xf]
      %v830 = vld [vmem:[%s823 + $0x18] sm:$0xf]
      %v831 = vld [vmem:[%s823 + $0x1c] sm:$0xf]
      %v832 = vld [vmem:[%s823 + $0x20] sm:$0xf]
      %v833 = vld [vmem:[%s823 + $0x24] sm:$0xf]
      %v834 = vld [vmem:[%s823 + $0x28] sm:$0xf]
      %v836 = vunpack.c.l.b16 %v822
      %v837 = vpack.c.b16 %v723, %v836
      %v838 = vrot.slane %v837, 1
      %v839 = vrot.slane %v726, 1
      %v840 = vsel %vm388, %v838, %v839
      %v852 = vunpack.c.l.b16 %v824
      %v853 = vunpack.c.l.b16 %v825
      %v854 = vunpack.c.l.b16 %v826
      %v855 = vunpack.c.l.b16 %v827
      %v856 = vunpack.c.l.b16 %v828
      %v857 = vunpack.c.l.b16 %v829
      %v858 = vunpack.c.l.b16 %v830
      %v859 = vunpack.c.l.b16 %v831
      %v860 = vunpack.c.l.b16 %v832
      %v861 = vunpack.c.l.b16 %v833
      %v862 = vunpack.c.l.b16 %v834
      %v863 = vpack.c.b16 %v853, %v852
      %v864 = vpack.c.b16 %v855, %v854
      %v865 = vpack.c.b16 %v857, %v856
      %v866 = vpack.c.b16 %v859, %v858
      %v867 = vpack.c.b16 %v861, %v860
      %v868 = vpack.c.b16 %v862, %v862
      %v875 = vsel %vm425, %v840, 0
      %v878 = vsel %vm429, %v868, 0
      %880 = vmatprep.subr.bf16.mxu0 0
      %881 = vmatpush1.bf16.msra.mxu0 0
      %882 = vmatprep.subr.bf16.mxu0 0
      %883 = vmatpush1.bf16.msra.mxu0 0
      %884 = vmatprep.subr.bf16.mxu0 0
      %885 = vmatpush1.bf16.msra.mxu0 %v878
      %886 = vmatprep.subr.bf16.mxu0 0
      %887 = vmatpush1.bf16.msra.mxu0 %v867
      %888 = vmatprep.subr.bf16.mxu0 0
      %889 = vmatpush1.bf16.msra.mxu0 %v866
      %890 = vmatprep.subr.bf16.mxu0 0
      %891 = vmatpush1.bf16.msra.mxu0 %v865
      %892 = vmatprep.subr.bf16.mxu0 0
      %893 = vmatpush1.bf16.msra.mxu0 %v864
      %894 = vmatprep.subr.bf16.mxu0 0
      %895 = vmatpush1.bf16.msra.mxu0 %v863
      %896 = vmatprep.subr.bf16.mxu0 0
      %897 = vmatpush2.bf16.msra.mxu0 0
      %898 = vmatprep.subr.bf16.mxu0 0
      %899 = vmatpush2.bf16.msra.mxu0 0
      %900 = vmatprep.subr.bf16.mxu0 0
      %901 = vmatpush2.bf16.msra.mxu0 0
      %902 = vmatprep.subr.bf16.mxu0 0
      %903 = vmatpush2.bf16.msra.mxu0 0
      %904 = vmatprep.subr.bf16.mxu0 0
      %905 = vmatpush2.bf16.msra.mxu0 0
      %906 = vmatprep.subr.bf16.mxu0 0
      %907 = vmatpush2.bf16.msra.mxu0 0
      %908 = vmatprep.subr.bf16.mxu0 0
      %909 = vmatpush2.bf16.msra.mxu0 0
      %910 = vmatprep.subr.bf16.mxu0 0
      %911 = vmatpush2.bf16.msra.mxu0 0
      %912 = vmatprep.mubr.bf16.mxu0 0
      %913 = vmatmul.mubr.bf16.gmra.mxu0 %v875
      %v914 = vpop.f32.mrf.mxu0
      %v915 = vadd.f32 0.0, %v914
      %v916 = vpop.f32.mrf.mxu0
      %v917 = vpop.f32.mrf.mxu0
      %v918 = vadd.f32 0.0, %v917
      %v919 = vpop.f32.mrf.mxu0
      %920 = vdwg.mxu0
      %v921 = vadd.f32 %v820, %v915
      %v922 = vadd.f32 %v821, %v918
      %v923 = vld [vmem:[%s342 + $0x8] sm:$0x3]
      %s924 = scalar_lea.vmem %s2, 88
      %v925 = vld [vmem:[%s924] sm:$0xf]
      %v926 = vld [vmem:[%s924 + $0x4] sm:$0xf]
      %v927 = vld [vmem:[%s924 + $0x8] sm:$0xf]
      %v928 = vld [vmem:[%s924 + $0xc] sm:$0xf]
      %v929 = vld [vmem:[%s924 + $0x10] sm:$0xf]
      %v930 = vld [vmem:[%s924 + $0x14] sm:$0xf]
      %v931 = vld [vmem:[%s924 + $0x18] sm:$0xf]
      %v932 = vld [vmem:[%s924 + $0x1c] sm:$0xf]
      %v933 = vld [vmem:[%s924 + $0x20] sm:$0xf]
      %v934 = vld [vmem:[%s924 + $0x24] sm:$0xf]
      %v935 = vld [vmem:[%s924 + $0x28] sm:$0xf]
      %v937 = vunpack.c.l.b16 %v923
      %v938 = vpack.c.b16 %v937, %v937
      %v940 = vshrl.u32 %v837, 16
      %v942 = vrot.slane %v940, 1
      %v943 = vshll.u32 %v837, 16
      %v945 = vrot.slane %v943, 2
      %v946 = vor.u32 %v942, %v945
      %v948 = vshrl.u32 %v938, 16
      %v950 = vrot.slane %v948, 1
      %v951 = vshll.u32 %v938, 16
      %v953 = vrot.slane %v951, 2
      %v954 = vor.u32 %v950, %v953
      %v955 = vsel %vm492, %v946, %v954
      %v967 = vunpack.c.l.b16 %v925
      %v968 = vunpack.c.l.b16 %v926
      %v969 = vunpack.c.l.b16 %v927
      %v970 = vunpack.c.l.b16 %v928
      %v971 = vunpack.c.l.b16 %v929
      %v972 = vunpack.c.l.b16 %v930
      %v973 = vunpack.c.l.b16 %v931
      %v974 = vunpack.c.l.b16 %v932
      %v975 = vunpack.c.l.b16 %v933
      %v976 = vunpack.c.l.b16 %v934
      %v977 = vunpack.c.l.b16 %v935
      %v978 = vpack.c.b16 %v968, %v967
      %v979 = vpack.c.b16 %v970, %v969
      %v980 = vpack.c.b16 %v972, %v971
      %v981 = vpack.c.b16 %v974, %v973
      %v982 = vpack.c.b16 %v976, %v975
      %v983 = vpack.c.b16 %v977, %v977
      %v990 = vsel %vm425, %v955, 0
      %v993 = vsel %vm429, %v983, 0
      %995 = vmatprep.subr.bf16.mxu0 0
      %996 = vmatpush1.bf16.msra.mxu0 0
      %997 = vmatprep.subr.bf16.mxu0 0
      %998 = vmatpush1.bf16.msra.mxu0 0
      %999 = vmatprep.subr.bf16.mxu0 0
      %1000 = vmatpush1.bf16.msra.mxu0 %v993
      %1001 = vmatprep.subr.bf16.mxu0 0
      %1002 = vmatpush1.bf16.msra.mxu0 %v982
      %1003 = vmatprep.subr.bf16.mxu0 0
      %1004 = vmatpush1.bf16.msra.mxu0 %v981
      %1005 = vmatprep.subr.bf16.mxu0 0
      %1006 = vmatpush1.bf16.msra.mxu0 %v980
      %1007 = vmatprep.subr.bf16.mxu0 0
      %1008 = vmatpush1.bf16.msra.mxu0 %v979
      %1009 = vmatprep.subr.bf16.mxu0 0
      %1010 = vmatpush1.bf16.msra.mxu0 %v978
      %1011 = vmatprep.subr.bf16.mxu0 0
      %1012 = vmatpush2.bf16.msra.mxu0 0
      %1013 = vmatprep.subr.bf16.mxu0 0
      %1014 = vmatpush2.bf16.msra.mxu0 0
      %1015 = vmatprep.subr.bf16.mxu0 0
      %1016 = vmatpush2.bf16.msra.mxu0 0
      %1017 = vmatprep.subr.bf16.mxu0 0
      %1018 = vmatpush2.bf16.msra.mxu0 0
      %1019 = vmatprep.subr.bf16.mxu0 0
      %1020 = vmatpush2.bf16.msra.mxu0 0
      %1021 = vmatprep.subr.bf16.mxu0 0
      %1022 = vmatpush2.bf16.msra.mxu0 0
      %1023 = vmatprep.subr.bf16.mxu0 0
      %1024 = vmatpush2.bf16.msra.mxu0 0
      %1025 = vmatprep.subr.bf16.mxu0 0
      %1026 = vmatpush2.bf16.msra.mxu0 0
      %1027 = vmatprep.mubr.bf16.mxu0 0
      %1028 = vmatmul.mubr.bf16.gmra.mxu0 %v990
      %v1029 = vpop.f32.mrf.mxu0
      %v1030 = vadd.f32 0.0, %v1029
      %v1031 = vpop.f32.mrf.mxu0
      %v1032 = vpop.f32.mrf.mxu0
      %v1033 = vadd.f32 0.0, %v1032
      %v1034 = vpop.f32.mrf.mxu0
      %1035 = vdwg.mxu0
      %v1036 = vadd.f32 %v921, %v1030
      %v1037 = vadd.f32 %v922, %v1033
      %v1038 = vld [vmem:[%s342] sm:$0xc]
      %s1039 = scalar_lea.vmem %s2, 132
      %v1040 = vld [vmem:[%s1039] sm:$0xf]
      %v1041 = vld [vmem:[%s1039 + $0x4] sm:$0xf]
      %v1042 = vld [vmem:[%s1039 + $0x8] sm:$0xf]
      %v1043 = vld [vmem:[%s1039 + $0xc] sm:$0xf]
      %v1044 = vld [vmem:[%s1039 + $0x10] sm:$0xf]
      %v1045 = vld [vmem:[%s1039 + $0x14] sm:$0xf]
      %v1046 = vld [vmem:[%s1039 + $0x18] sm:$0xf]
      %v1047 = vld [vmem:[%s1039 + $0x1c] sm:$0xf]
      %v1048 = vld [vmem:[%s1039 + $0x20] sm:$0xf]
      %v1049 = vld [vmem:[%s1039 + $0x24] sm:$0xf]
      %v1050 = vld [vmem:[%s1039 + $0x28] sm:$0xf]
      %v1052 = vunpack.c.l.b16 %v1038
      %v1053 = vpack.c.b16 %v723, %v1052
      %v1054 = vrot.slane %v1053, 2
      %v1055 = vrot.slane %v938, 2
      %v1056 = vsel %vm608, %v1054, %v1055
      %v1068 = vunpack.c.l.b16 %v1040
      %v1069 = vunpack.c.l.b16 %v1041
      %v1070 = vunpack.c.l.b16 %v1042
      %v1071 = vunpack.c.l.b16 %v1043
      %v1072 = vunpack.c.l.b16 %v1044
      %v1073 = vunpack.c.l.b16 %v1045
      %v1074 = vunpack.c.l.b16 %v1046
      %v1075 = vunpack.c.l.b16 %v1047
      %v1076 = vunpack.c.l.b16 %v1048
      %v1077 = vunpack.c.l.b16 %v1049
      %v1078 = vunpack.c.l.b16 %v1050
      %v1079 = vpack.c.b16 %v1069, %v1068
      %v1080 = vpack.c.b16 %v1071, %v1070
      %v1081 = vpack.c.b16 %v1073, %v1072
      %v1082 = vpack.c.b16 %v1075, %v1074
      %v1083 = vpack.c.b16 %v1077, %v1076
      %v1084 = vpack.c.b16 %v1078, %v1078
      %v1091 = vsel %vm425, %v1056, 0
      %v1094 = vsel %vm429, %v1084, 0
      %1096 = vmatprep.subr.bf16.mxu0 0
      %1097 = vmatpush1.bf16.msra.mxu0 0
      %1098 = vmatprep.subr.bf16.mxu0 0
      %1099 = vmatpush1.bf16.msra.mxu0 0
      %1100 = vmatprep.subr.bf16.mxu0 0
      %1101 = vmatpush1.bf16.msra.mxu0 %v1094
      %1102 = vmatprep.subr.bf16.mxu0 0
      %1103 = vmatpush1.bf16.msra.mxu0 %v1083
      %1104 = vmatprep.subr.bf16.mxu0 0
      %1105 = vmatpush1.bf16.msra.mxu0 %v1082
      %1106 = vmatprep.subr.bf16.mxu0 0
      %1107 = vmatpush1.bf16.msra.mxu0 %v1081
      %1108 = vmatprep.subr.bf16.mxu0 0
      %1109 = vmatpush1.bf16.msra.mxu0 %v1080
      %1110 = vmatprep.subr.bf16.mxu0 0
      %1111 = vmatpush1.bf16.msra.mxu0 %v1079
      %1112 = vmatprep.subr.bf16.mxu0 0
      %1113 = vmatpush2.bf16.msra.mxu0 0
      %1114 = vmatprep.subr.bf16.mxu0 0
      %1115 = vmatpush2.bf16.msra.mxu0 0
      %1116 = vmatprep.subr.bf16.mxu0 0
      %1117 = vmatpush2.bf16.msra.mxu0 0
      %1118 = vmatprep.subr.bf16.mxu0 0
      %1119 = vmatpush2.bf16.msra.mxu0 0
      %1120 = vmatprep.subr.bf16.mxu0 0
      %1121 = vmatpush2.bf16.msra.mxu0 0
      %1122 = vmatprep.subr.bf16.mxu0 0
      %1123 = vmatpush2.bf16.msra.mxu0 0
      %1124 = vmatprep.subr.bf16.mxu0 0
      %1125 = vmatpush2.bf16.msra.mxu0 0
      %1126 = vmatprep.subr.bf16.mxu0 0
      %1127 = vmatpush2.bf16.msra.mxu0 0
      %1128 = vmatprep.mubr.bf16.mxu0 0
      %1129 = vmatmul.mubr.bf16.gmra.mxu0 %v1091
      %v1130 = vpop.f32.mrf.mxu0
      %v1131 = vadd.f32 0.0, %v1130
      %v1132 = vpop.f32.mrf.mxu0
      %v1133 = vpop.f32.mrf.mxu0
      %v1134 = vadd.f32 0.0, %v1133
      %v1135 = vpop.f32.mrf.mxu0
      %1136 = vdwg.mxu0
      %v1137 = vadd.f32 %v1036, %v1131
      %v1138 = vadd.f32 %v1037, %v1134
      %v1139 = vld [vmem:[%s342 + $0x8] sm:$0x7]
      %s1140 = scalar_lea.vmem %s2, 176
      %v1141 = vld [vmem:[%s1140] sm:$0xf]
      %v1142 = vld [vmem:[%s1140 + $0x4] sm:$0xf]
      %v1143 = vld [vmem:[%s1140 + $0x8] sm:$0xf]
      %v1144 = vld [vmem:[%s1140 + $0xc] sm:$0xf]
      %v1145 = vld [vmem:[%s1140 + $0x10] sm:$0xf]
      %v1146 = vld [vmem:[%s1140 + $0x14] sm:$0xf]
      %v1147 = vld [vmem:[%s1140 + $0x18] sm:$0xf]
      %v1148 = vld [vmem:[%s1140 + $0x1c] sm:$0xf]
      %v1149 = vld [vmem:[%s1140 + $0x20] sm:$0xf]
      %v1150 = vld [vmem:[%s1140 + $0x24] sm:$0xf]
      %v1151 = vld [vmem:[%s1140 + $0x28] sm:$0xf]
      %v1153 = vunpack.c.l.b16 %v1139
      %v1154 = vpack.c.b16 %v1153, %v1153
      %vm1155 = vsmask.f32 5376
      %v1157 = vshrl.u32 %v1053, 16
      %v1159 = vrot.slane %v1157, 2
      %v1160 = vshll.u32 %v1053, 16
      %v1162 = vrot.slane %v1160, 3
      %v1163 = vor.u32 %v1159, %v1162
      %v1165 = vshrl.u32 %v1154, 16
      %v1167 = vrot.slane %v1165, 2
      %v1168 = vshll.u32 %v1154, 16
      %v1170 = vrot.slane %v1168, 3
      %v1171 = vor.u32 %v1167, %v1170
      %v1172 = vsel %vm1155, %v1163, %v1171
      %v1184 = vunpack.c.l.b16 %v1141
      %v1185 = vunpack.c.l.b16 %v1142
      %v1186 = vunpack.c.l.b16 %v1143
      %v1187 = vunpack.c.l.b16 %v1144
      %v1188 = vunpack.c.l.b16 %v1145
      %v1189 = vunpack.c.l.b16 %v1146
      %v1190 = vunpack.c.l.b16 %v1147
      %v1191 = vunpack.c.l.b16 %v1148
      %v1192 = vunpack.c.l.b16 %v1149
      %v1193 = vunpack.c.l.b16 %v1150
      %v1194 = vunpack.c.l.b16 %v1151
      %v1195 = vpack.c.b16 %v1185, %v1184
      %v1196 = vpack.c.b16 %v1187, %v1186
      %v1197 = vpack.c.b16 %v1189, %v1188
      %v1198 = vpack.c.b16 %v1191, %v1190
      %v1199 = vpack.c.b16 %v1193, %v1192
      %v1200 = vpack.c.b16 %v1194, %v1194
      %v1207 = vsel %vm425, %v1172, 0
      %v1210 = vsel %vm429, %v1200, 0
      %1212 = vmatprep.subr.bf16.mxu0 0
      %1213 = vmatpush1.bf16.msra.mxu0 0
      %1214 = vmatprep.subr.bf16.mxu0 0
      %1215 = vmatpush1.bf16.msra.mxu0 0
      %1216 = vmatprep.subr.bf16.mxu0 0
      %1217 = vmatpush1.bf16.msra.mxu0 %v1210
      %1218 = vmatprep.subr.bf16.mxu0 0
      %1219 = vmatpush1.bf16.msra.mxu0 %v1199
      %1220 = vmatprep.subr.bf16.mxu0 0
      %1221 = vmatpush1.bf16.msra.mxu0 %v1198
      %1222 = vmatprep.subr.bf16.mxu0 0
      %1223 = vmatpush1.bf16.msra.mxu0 %v1197
      %1224 = vmatprep.subr.bf16.mxu0 0
      %1225 = vmatpush1.bf16.msra.mxu0 %v1196
      %1226 = vmatprep.subr.bf16.mxu0 0
      %1227 = vmatpush1.bf16.msra.mxu0 %v1195
      %1228 = vmatprep.subr.bf16.mxu0 0
      %1229 = vmatpush2.bf16.msra.mxu0 0
      %1230 = vmatprep.subr.bf16.mxu0 0
      %1231 = vmatpush2.bf16.msra.mxu0 0
      %1232 = vmatprep.subr.bf16.mxu0 0
      %1233 = vmatpush2.bf16.msra.mxu0 0
      %1234 = vmatprep.subr.bf16.mxu0 0
      %1235 = vmatpush2.bf16.msra.mxu0 0
      %1236 = vmatprep.subr.bf16.mxu0 0
      %1237 = vmatpush2.bf16.msra.mxu0 0
      %1238 = vmatprep.subr.bf16.mxu0 0
      %1239 = vmatpush2.bf16.msra.mxu0 0
      %1240 = vmatprep.subr.bf16.mxu0 0
      %1241 = vmatpush2.bf16.msra.mxu0 0
      %1242 = vmatprep.subr.bf16.mxu0 0
      %1243 = vmatpush2.bf16.msra.mxu0 0
      %1244 = vmatprep.mubr.bf16.mxu0 0
      %1245 = vmatmul.mubr.bf16.gmra.mxu0 %v1207
      %v1246 = vpop.f32.mrf.mxu0
      %v1247 = vadd.f32 0.0, %v1246
      %v1248 = vpop.f32.mrf.mxu0
      %v1249 = vpop.f32.mrf.mxu0
      %v1250 = vadd.f32 0.0, %v1249
      %v1251 = vpop.f32.mrf.mxu0
      %1252 = vdwg.mxu0
      %v1253 = vadd.f32 %v1137, %v1247
      %v1254 = vadd.f32 %v1138, %v1250
      %v1255 = vmax.f32 %v1253, 0.0
      %v1256 = vmax.f32 %v1254, 0.0
      %1257 = vst [vmem:[%s352] sm:$0xff] %v1255
      %1258 = vst [vmem:[%s352 + $0x8] sm:$0xff] %v1256
      %v1259 = vld [vmem:[%s6] sm:$0x1]
      %v1261 = vlaneseq
      %v1262 = vshrl.u32 %v1261, 7
      %v1263 = vsub.s32 0, %v1262
      %v1264 = vrot.slane %v1259, %v1263
      %v1266 = vld [vmem:[%s342] sm:$0xf]
      %v1267 = vld [vmem:[%s342 + $0x4] sm:$0xf]
      %v1268 = vld [vmem:[%s3] sm:$0xf]
      %v1269 = vld [vmem:[%s3 + $0x4] sm:$0xf]
      %v1270 = vld [vmem:[%s3 + $0x8] sm:$0xf]
      %v1271 = vld [vmem:[%s3 + $0xc] sm:$0xf]
      %v1272 = vld [vmem:[%s3 + $0x10] sm:$0xf]
      %v1273 = vld [vmem:[%s3 + $0x14] sm:$0xf]
      %v1274 = vld [vmem:[%s3 + $0x18] sm:$0xf]
      %v1275 = vld [vmem:[%s3 + $0x1c] sm:$0xf]
      %v1276 = vld [vmem:[%s3 + $0x20] sm:$0xf]
      %v1277 = vld [vmem:[%s3 + $0x24] sm:$0xf]
      %v1278 = vld [vmem:[%s3 + $0x28] sm:$0xf]
      %v1281 = vunpack.c.l.b16 %v1266
      %v1282 = vunpack.c.l.b16 %v1267
      %v1283 = vpack.c.b16 %v1282, %v1281
      %v1295 = vunpack.c.l.b16 %v1268
      %v1296 = vunpack.c.l.b16 %v1269
      %v1297 = vunpack.c.l.b16 %v1270
      %v1298 = vunpack.c.l.b16 %v1271
      %v1299 = vunpack.c.l.b16 %v1272
      %v1300 = vunpack.c.l.b16 %v1273
      %v1301 = vunpack.c.l.b16 %v1274
      %v1302 = vunpack.c.l.b16 %v1275
      %v1303 = vunpack.c.l.b16 %v1276
      %v1304 = vunpack.c.l.b16 %v1277
      %v1305 = vunpack.c.l.b16 %v1278
      %v1306 = vpack.c.b16 %v1296, %v1295
      %v1307 = vpack.c.b16 %v1298, %v1297
      %v1308 = vpack.c.b16 %v1300, %v1299
      %v1309 = vpack.c.b16 %v1302, %v1301
      %v1310 = vpack.c.b16 %v1304, %v1303
      %v1311 = vpack.c.b16 %v1305, %v1305
      %v1318 = vsel %vm425, %v1283, 0
      %v1321 = vsel %vm429, %v1311, 0
      %1323 = vmatprep.subr.bf16.mxu0 0
      %1324 = vmatpush1.bf16.msra.mxu0 0
      %1325 = vmatprep.subr.bf16.mxu0 0
      %1326 = vmatpush1.bf16.msra.mxu0 0
      %1327 = vmatprep.subr.bf16.mxu0 0
      %1328 = vmatpush1.bf16.msra.mxu0 %v1321
      %1329 = vmatprep.subr.bf16.mxu0 0
      %1330 = vmatpush1.bf16.msra.mxu0 %v1310
      %1331 = vmatprep.subr.bf16.mxu0 0
      %1332 = vmatpush1.bf16.msra.mxu0 %v1309
      %1333 = vmatprep.subr.bf16.mxu0 0
      %1334 = vmatpush1.bf16.msra.mxu0 %v1308
      %1335 = vmatprep.subr.bf16.mxu0 0
      %1336 = vmatpush1.bf16.msra.mxu0 %v1307
      %1337 = vmatprep.subr.bf16.mxu0 0
      %1338 = vmatpush1.bf16.msra.mxu0 %v1306
      %1339 = vmatprep.subr.bf16.mxu0 0
      %1340 = vmatpush2.bf16.msra.mxu0 0
      %1341 = vmatprep.subr.bf16.mxu0 0
      %1342 = vmatpush2.bf16.msra.mxu0 0
      %1343 = vmatprep.subr.bf16.mxu0 0
      %1344 = vmatpush2.bf16.msra.mxu0 0
      %1345 = vmatprep.subr.bf16.mxu0 0
      %1346 = vmatpush2.bf16.msra.mxu0 0
      %1347 = vmatprep.subr.bf16.mxu0 0
      %1348 = vmatpush2.bf16.msra.mxu0 0
      %1349 = vmatprep.subr.bf16.mxu0 0
      %1350 = vmatpush2.bf16.msra.mxu0 0
      %1351 = vmatprep.subr.bf16.mxu0 0
      %1352 = vmatpush2.bf16.msra.mxu0 0
      %1353 = vmatprep.subr.bf16.mxu0 0
      %1354 = vmatpush2.bf16.msra.mxu0 0
      %1355 = vmatprep.mubr.bf16.mxu0 0
      %1356 = vmatmul.mubr.bf16.gmra.mxu0 %v1318
      %v1357 = vpop.f32.mrf.mxu0
      %v1358 = vadd.f32 0.0, %v1357
      %v1359 = vpop.f32.mrf.mxu0
      %v1360 = vpop.f32.mrf.mxu0
      %v1361 = vadd.f32 0.0, %v1360
      %v1362 = vpop.f32.mrf.mxu0
      %1363 = vdwg.mxu0
      %v1364 = vadd.f32 %v1264, %v1358
      %v1365 = vadd.f32 %v1264, %v1361
      %v1366 = vld [vmem:[%s342] sm:$0xf]
      %v1367 = vld [vmem:[%s342 + $0x4] sm:$0xf]
      %v1368 = vld [vmem:[%s342 + $0x8] sm:$0x1]
      %s1369 = scalar_lea.vmem %s3, 44
      %v1370 = vld [vmem:[%s1369] sm:$0xf]
      %v1371 = vld [vmem:[%s1369 + $0x4] sm:$0xf]
      %v1372 = vld [vmem:[%s1369 + $0x8] sm:$0xf]
      %v1373 = vld [vmem:[%s1369 + $0xc] sm:$0xf]
      %v1374 = vld [vmem:[%s1369 + $0x10] sm:$0xf]
      %v1375 = vld [vmem:[%s1369 + $0x14] sm:$0xf]
      %v1376 = vld [vmem:[%s1369 + $0x18] sm:$0xf]
      %v1377 = vld [vmem:[%s1369 + $0x1c] sm:$0xf]
      %v1378 = vld [vmem:[%s1369 + $0x20] sm:$0xf]
      %v1379 = vld [vmem:[%s1369 + $0x24] sm:$0xf]
      %v1380 = vld [vmem:[%s1369 + $0x28] sm:$0xf]
      %v1384 = vunpack.c.l.b16 %v1366
      %v1385 = vunpack.c.l.b16 %v1367
      %v1386 = vunpack.c.l.b16 %v1368
      %v1387 = vpack.c.b16 %v1385, %v1384
      %v1388 = vpack.c.b16 %v1386, %v1386
      %v1390 = vshrl.u32 %v1387, 16
      %v1392 = vshll.u32 %v1387, 16
      %v1394 = vrot.slane %v1392, 1
      %v1395 = vor.u32 %v1390, %v1394
      %v1397 = vshll.u32 %v1388, 16
      %v1399 = vrot.slane %v1397, 1
      %v1400 = vsel %vm727, %v1395, %v1399
      %v1412 = vunpack.c.l.b16 %v1370
      %v1413 = vunpack.c.l.b16 %v1371
      %v1414 = vunpack.c.l.b16 %v1372
      %v1415 = vunpack.c.l.b16 %v1373
      %v1416 = vunpack.c.l.b16 %v1374
      %v1417 = vunpack.c.l.b16 %v1375
      %v1418 = vunpack.c.l.b16 %v1376
      %v1419 = vunpack.c.l.b16 %v1377
      %v1420 = vunpack.c.l.b16 %v1378
      %v1421 = vunpack.c.l.b16 %v1379
      %v1422 = vunpack.c.l.b16 %v1380
      %v1423 = vpack.c.b16 %v1413, %v1412
      %v1424 = vpack.c.b16 %v1415, %v1414
      %v1425 = vpack.c.b16 %v1417, %v1416
      %v1426 = vpack.c.b16 %v1419, %v1418
      %v1427 = vpack.c.b16 %v1421, %v1420
      %v1428 = vpack.c.b16 %v1422, %v1422
      %v1435 = vsel %vm425, %v1400, 0
      %v1438 = vsel %vm429, %v1428, 0
      %1440 = vmatprep.subr.bf16.mxu0 0
      %1441 = vmatpush1.bf16.msra.mxu0 0
      %1442 = vmatprep.subr.bf16.mxu0 0
      %1443 = vmatpush1.bf16.msra.mxu0 0
      %1444 = vmatprep.subr.bf16.mxu0 0
      %1445 = vmatpush1.bf16.msra.mxu0 %v1438
      %1446 = vmatprep.subr.bf16.mxu0 0
      %1447 = vmatpush1.bf16.msra.mxu0 %v1427
      %1448 = vmatprep.subr.bf16.mxu0 0
      %1449 = vmatpush1.bf16.msra.mxu0 %v1426
      %1450 = vmatprep.subr.bf16.mxu0 0
      %1451 = vmatpush1.bf16.msra.mxu0 %v1425
      %1452 = vmatprep.subr.bf16.mxu0 0
      %1453 = vmatpush1.bf16.msra.mxu0 %v1424
      %1454 = vmatprep.subr.bf16.mxu0 0
      %1455 = vmatpush1.bf16.msra.mxu0 %v1423
      %1456 = vmatprep.subr.bf16.mxu0 0
      %1457 = vmatpush2.bf16.msra.mxu0 0
      %1458 = vmatprep.subr.bf16.mxu0 0
      %1459 = vmatpush2.bf16.msra.mxu0 0
      %1460 = vmatprep.subr.bf16.mxu0 0
      %1461 = vmatpush2.bf16.msra.mxu0 0
      %1462 = vmatprep.subr.bf16.mxu0 0
      %1463 = vmatpush2.bf16.msra.mxu0 0
      %1464 = vmatprep.subr.bf16.mxu0 0
      %1465 = vmatpush2.bf16.msra.mxu0 0
      %1466 = vmatprep.subr.bf16.mxu0 0
      %1467 = vmatpush2.bf16.msra.mxu0 0
      %1468 = vmatprep.subr.bf16.mxu0 0
      %1469 = vmatpush2.bf16.msra.mxu0 0
      %1470 = vmatprep.subr.bf16.mxu0 0
      %1471 = vmatpush2.bf16.msra.mxu0 0
      %1472 = vmatprep.mubr.bf16.mxu0 0
      %1473 = vmatmul.mubr.bf16.gmra.mxu0 %v1435
      %v1474 = vpop.f32.mrf.mxu0
      %v1475 = vadd.f32 0.0, %v1474
      %v1476 = vpop.f32.mrf.mxu0
      %v1477 = vpop.f32.mrf.mxu0
      %v1478 = vadd.f32 0.0, %v1477
      %v1479 = vpop.f32.mrf.mxu0
      %1480 = vdwg.mxu0
      %v1481 = vadd.f32 %v1364, %v1475
      %v1482 = vadd.f32 %v1365, %v1478
      %v1483 = vld [vmem:[%s342] sm:$0xe]
      %s1484 = scalar_lea.vmem %s3, 88
      %v1485 = vld [vmem:[%s1484] sm:$0xf]
      %v1486 = vld [vmem:[%s1484 + $0x4] sm:$0xf]
      %v1487 = vld [vmem:[%s1484 + $0x8] sm:$0xf]
      %v1488 = vld [vmem:[%s1484 + $0xc] sm:$0xf]
      %v1489 = vld [vmem:[%s1484 + $0x10] sm:$0xf]
      %v1490 = vld [vmem:[%s1484 + $0x14] sm:$0xf]
      %v1491 = vld [vmem:[%s1484 + $0x18] sm:$0xf]
      %v1492 = vld [vmem:[%s1484 + $0x1c] sm:$0xf]
      %v1493 = vld [vmem:[%s1484 + $0x20] sm:$0xf]
      %v1494 = vld [vmem:[%s1484 + $0x24] sm:$0xf]
      %v1495 = vld [vmem:[%s1484 + $0x28] sm:$0xf]
      %v1497 = vunpack.c.l.b16 %v1483
      %v1498 = vpack.c.b16 %v1385, %v1497
      %v1499 = vrot.slane %v1498, 1
      %v1500 = vrot.slane %v1388, 1
      %v1501 = vsel %vm388, %v1499, %v1500
      %v1513 = vunpack.c.l.b16 %v1485
      %v1514 = vunpack.c.l.b16 %v1486
      %v1515 = vunpack.c.l.b16 %v1487
      %v1516 = vunpack.c.l.b16 %v1488
      %v1517 = vunpack.c.l.b16 %v1489
      %v1518 = vunpack.c.l.b16 %v1490
      %v1519 = vunpack.c.l.b16 %v1491
      %v1520 = vunpack.c.l.b16 %v1492
      %v1521 = vunpack.c.l.b16 %v1493
      %v1522 = vunpack.c.l.b16 %v1494
      %v1523 = vunpack.c.l.b16 %v1495
      %v1524 = vpack.c.b16 %v1514, %v1513
      %v1525 = vpack.c.b16 %v1516, %v1515
      %v1526 = vpack.c.b16 %v1518, %v1517
      %v1527 = vpack.c.b16 %v1520, %v1519
      %v1528 = vpack.c.b16 %v1522, %v1521
      %v1529 = vpack.c.b16 %v1523, %v1523
      %v1536 = vsel %vm425, %v1501, 0
      %v1539 = vsel %vm429, %v1529, 0
      %1541 = vmatprep.subr.bf16.mxu0 0
      %1542 = vmatpush1.bf16.msra.mxu0 0
      %1543 = vmatprep.subr.bf16.mxu0 0
      %1544 = vmatpush1.bf16.msra.mxu0 0
      %1545 = vmatprep.subr.bf16.mxu0 0
      %1546 = vmatpush1.bf16.msra.mxu0 %v1539
      %1547 = vmatprep.subr.bf16.mxu0 0
      %1548 = vmatpush1.bf16.msra.mxu0 %v1528
      %1549 = vmatprep.subr.bf16.mxu0 0
      %1550 = vmatpush1.bf16.msra.mxu0 %v1527
      %1551 = vmatprep.subr.bf16.mxu0 0
      %1552 = vmatpush1.bf16.msra.mxu0 %v1526
      %1553 = vmatprep.subr.bf16.mxu0 0
      %1554 = vmatpush1.bf16.msra.mxu0 %v1525
      %1555 = vmatprep.subr.bf16.mxu0 0
      %1556 = vmatpush1.bf16.msra.mxu0 %v1524
      %1557 = vmatprep.subr.bf16.mxu0 0
      %1558 = vmatpush2.bf16.msra.mxu0 0
      %1559 = vmatprep.subr.bf16.mxu0 0
      %1560 = vmatpush2.bf16.msra.mxu0 0
      %1561 = vmatprep.subr.bf16.mxu0 0
      %1562 = vmatpush2.bf16.msra.mxu0 0
      %1563 = vmatprep.subr.bf16.mxu0 0
      %1564 = vmatpush2.bf16.msra.mxu0 0
      %1565 = vmatprep.subr.bf16.mxu0 0
      %1566 = vmatpush2.bf16.msra.mxu0 0
      %1567 = vmatprep.subr.bf16.mxu0 0
      %1568 = vmatpush2.bf16.msra.mxu0 0
      %1569 = vmatprep.subr.bf16.mxu0 0
      %1570 = vmatpush2.bf16.msra.mxu0 0
      %1571 = vmatprep.subr.bf16.mxu0 0
      %1572 = vmatpush2.bf16.msra.mxu0 0
      %1573 = vmatprep.mubr.bf16.mxu0 0
      %1574 = vmatmul.mubr.bf16.gmra.mxu0 %v1536
      %v1575 = vpop.f32.mrf.mxu0
      %v1576 = vadd.f32 0.0, %v1575
      %v1577 = vpop.f32.mrf.mxu0
      %v1578 = vpop.f32.mrf.mxu0
      %v1579 = vadd.f32 0.0, %v1578
      %v1580 = vpop.f32.mrf.mxu0
      %1581 = vdwg.mxu0
      %v1582 = vadd.f32 %v1481, %v1576
      %v1583 = vadd.f32 %v1482, %v1579
      %v1584 = vld [vmem:[%s342 + $0x8] sm:$0x3]
      %s1585 = scalar_lea.vmem %s3, 132
      %v1586 = vld [vmem:[%s1585] sm:$0xf]
      %v1587 = vld [vmem:[%s1585 + $0x4] sm:$0xf]
      %v1588 = vld [vmem:[%s1585 + $0x8] sm:$0xf]
      %v1589 = vld [vmem:[%s1585 + $0xc] sm:$0xf]
      %v1590 = vld [vmem:[%s1585 + $0x10] sm:$0xf]
      %v1591 = vld [vmem:[%s1585 + $0x14] sm:$0xf]
      %v1592 = vld [vmem:[%s1585 + $0x18] sm:$0xf]
      %v1593 = vld [vmem:[%s1585 + $0x1c] sm:$0xf]
      %v1594 = vld [vmem:[%s1585 + $0x20] sm:$0xf]
      %v1595 = vld [vmem:[%s1585 + $0x24] sm:$0xf]
      %v1596 = vld [vmem:[%s1585 + $0x28] sm:$0xf]
      %v1598 = vunpack.c.l.b16 %v1584
      %v1599 = vpack.c.b16 %v1598, %v1598
      %v1601 = vshrl.u32 %v1498, 16
      %v1603 = vrot.slane %v1601, 1
      %v1604 = vshll.u32 %v1498, 16
      %v1606 = vrot.slane %v1604, 2
      %v1607 = vor.u32 %v1603, %v1606
      %v1609 = vshrl.u32 %v1599, 16
      %v1611 = vrot.slane %v1609, 1
      %v1612 = vshll.u32 %v1599, 16
      %v1614 = vrot.slane %v1612, 2
      %v1615 = vor.u32 %v1611, %v1614
      %v1616 = vsel %vm492, %v1607, %v1615
      %v1628 = vunpack.c.l.b16 %v1586
      %v1629 = vunpack.c.l.b16 %v1587
      %v1630 = vunpack.c.l.b16 %v1588
      %v1631 = vunpack.c.l.b16 %v1589
      %v1632 = vunpack.c.l.b16 %v1590
      %v1633 = vunpack.c.l.b16 %v1591
      %v1634 = vunpack.c.l.b16 %v1592
      %v1635 = vunpack.c.l.b16 %v1593
      %v1636 = vunpack.c.l.b16 %v1594
      %v1637 = vunpack.c.l.b16 %v1595
      %v1638 = vunpack.c.l.b16 %v1596
      %v1639 = vpack.c.b16 %v1629, %v1628
      %v1640 = vpack.c.b16 %v1631, %v1630
      %v1641 = vpack.c.b16 %v1633, %v1632
      %v1642 = vpack.c.b16 %v1635, %v1634
      %v1643 = vpack.c.b16 %v1637, %v1636
      %v1644 = vpack.c.b16 %v1638, %v1638
      %v1651 = vsel %vm425, %v1616, 0
      %v1654 = vsel %vm429, %v1644, 0
      %1656 = vmatprep.subr.bf16.mxu0 0
      %1657 = vmatpush1.bf16.msra.mxu0 0
      %1658 = vmatprep.subr.bf16.mxu0 0
      %1659 = vmatpush1.bf16.msra.mxu0 0
      %1660 = vmatprep.subr.bf16.mxu0 0
      %1661 = vmatpush1.bf16.msra.mxu0 %v1654
      %1662 = vmatprep.subr.bf16.mxu0 0
      %1663 = vmatpush1.bf16.msra.mxu0 %v1643
      %1664 = vmatprep.subr.bf16.mxu0 0
      %1665 = vmatpush1.bf16.msra.mxu0 %v1642
      %1666 = vmatprep.subr.bf16.mxu0 0
      %1667 = vmatpush1.bf16.msra.mxu0 %v1641
      %1668 = vmatprep.subr.bf16.mxu0 0
      %1669 = vmatpush1.bf16.msra.mxu0 %v1640
      %1670 = vmatprep.subr.bf16.mxu0 0
      %1671 = vmatpush1.bf16.msra.mxu0 %v1639
      %1672 = vmatprep.subr.bf16.mxu0 0
      %1673 = vmatpush2.bf16.msra.mxu0 0
      %1674 = vmatprep.subr.bf16.mxu0 0
      %1675 = vmatpush2.bf16.msra.mxu0 0
      %1676 = vmatprep.subr.bf16.mxu0 0
      %1677 = vmatpush2.bf16.msra.mxu0 0
      %1678 = vmatprep.subr.bf16.mxu0 0
      %1679 = vmatpush2.bf16.msra.mxu0 0
      %1680 = vmatprep.subr.bf16.mxu0 0
      %1681 = vmatpush2.bf16.msra.mxu0 0
      %1682 = vmatprep.subr.bf16.mxu0 0
      %1683 = vmatpush2.bf16.msra.mxu0 0
      %1684 = vmatprep.subr.bf16.mxu0 0
      %1685 = vmatpush2.bf16.msra.mxu0 0
      %1686 = vmatprep.subr.bf16.mxu0 0
      %1687 = vmatpush2.bf16.msra.mxu0 0
      %1688 = vmatprep.mubr.bf16.mxu0 0
      %1689 = vmatmul.mubr.bf16.gmra.mxu0 %v1651
      %v1690 = vpop.f32.mrf.mxu0
      %v1691 = vadd.f32 0.0, %v1690
      %v1692 = vpop.f32.mrf.mxu0
      %v1693 = vpop.f32.mrf.mxu0
      %v1694 = vadd.f32 0.0, %v1693
      %v1695 = vpop.f32.mrf.mxu0
      %1696 = vdwg.mxu0
      %v1697 = vadd.f32 %v1582, %v1691
      %v1698 = vadd.f32 %v1583, %v1694
      %v1699 = vld [vmem:[%s342] sm:$0xc]
      %s1700 = scalar_lea.vmem %s3, 176
      %v1701 = vld [vmem:[%s1700] sm:$0xf]
      %v1702 = vld [vmem:[%s1700 + $0x4] sm:$0xf]
      %v1703 = vld [vmem:[%s1700 + $0x8] sm:$0xf]
      %v1704 = vld [vmem:[%s1700 + $0xc] sm:$0xf]
      %v1705 = vld [vmem:[%s1700 + $0x10] sm:$0xf]
      %v1706 = vld [vmem:[%s1700 + $0x14] sm:$0xf]
      %v1707 = vld [vmem:[%s1700 + $0x18] sm:$0xf]
      %v1708 = vld [vmem:[%s1700 + $0x1c] sm:$0xf]
      %v1709 = vld [vmem:[%s1700 + $0x20] sm:$0xf]
      %v1710 = vld [vmem:[%s1700 + $0x24] sm:$0xf]
      %v1711 = vld [vmem:[%s1700 + $0x28] sm:$0xf]
      %v1713 = vunpack.c.l.b16 %v1699
      %v1714 = vpack.c.b16 %v1385, %v1713
      %v1715 = vrot.slane %v1714, 2
      %v1716 = vrot.slane %v1599, 2
      %v1717 = vsel %vm608, %v1715, %v1716
      %v1729 = vunpack.c.l.b16 %v1701
      %v1730 = vunpack.c.l.b16 %v1702
      %v1731 = vunpack.c.l.b16 %v1703
      %v1732 = vunpack.c.l.b16 %v1704
      %v1733 = vunpack.c.l.b16 %v1705
      %v1734 = vunpack.c.l.b16 %v1706
      %v1735 = vunpack.c.l.b16 %v1707
      %v1736 = vunpack.c.l.b16 %v1708
      %v1737 = vunpack.c.l.b16 %v1709
      %v1738 = vunpack.c.l.b16 %v1710
      %v1739 = vunpack.c.l.b16 %v1711
      %v1740 = vpack.c.b16 %v1730, %v1729
      %v1741 = vpack.c.b16 %v1732, %v1731
      %v1742 = vpack.c.b16 %v1734, %v1733
      %v1743 = vpack.c.b16 %v1736, %v1735
      %v1744 = vpack.c.b16 %v1738, %v1737
      %v1745 = vpack.c.b16 %v1739, %v1739
      %v1752 = vsel %vm425, %v1717, 0
      %v1755 = vsel %vm429, %v1745, 0
      %1757 = vmatprep.subr.bf16.mxu0 0
      %1758 = vmatpush1.bf16.msra.mxu0 0
      %1759 = vmatprep.subr.bf16.mxu0 0
      %1760 = vmatpush1.bf16.msra.mxu0 0
      %1761 = vmatprep.subr.bf16.mxu0 0
      %1762 = vmatpush1.bf16.msra.mxu0 %v1755
      %1763 = vmatprep.subr.bf16.mxu0 0
      %1764 = vmatpush1.bf16.msra.mxu0 %v1744
      %1765 = vmatprep.subr.bf16.mxu0 0
      %1766 = vmatpush1.bf16.msra.mxu0 %v1743
      %1767 = vmatprep.subr.bf16.mxu0 0
      %1768 = vmatpush1.bf16.msra.mxu0 %v1742
      %1769 = vmatprep.subr.bf16.mxu0 0
      %1770 = vmatpush1.bf16.msra.mxu0 %v1741
      %1771 = vmatprep.subr.bf16.mxu0 0
      %1772 = vmatpush1.bf16.msra.mxu0 %v1740
      %1773 = vmatprep.subr.bf16.mxu0 0
      %1774 = vmatpush2.bf16.msra.mxu0 0
      %1775 = vmatprep.subr.bf16.mxu0 0
      %1776 = vmatpush2.bf16.msra.mxu0 0
      %1777 = vmatprep.subr.bf16.mxu0 0
      %1778 = vmatpush2.bf16.msra.mxu0 0
      %1779 = vmatprep.subr.bf16.mxu0 0
      %1780 = vmatpush2.bf16.msra.mxu0 0
      %1781 = vmatprep.subr.bf16.mxu0 0
      %1782 = vmatpush2.bf16.msra.mxu0 0
      %1783 = vmatprep.subr.bf16.mxu0 0
      %1784 = vmatpush2.bf16.msra.mxu0 0
      %1785 = vmatprep.subr.bf16.mxu0 0
      %1786 = vmatpush2.bf16.msra.mxu0 0
      %1787 = vmatprep.subr.bf16.mxu0 0
      %1788 = vmatpush2.bf16.msra.mxu0 0
      %1789 = vmatprep.mubr.bf16.mxu0 0
      %1790 = vmatmul.mubr.bf16.gmra.mxu0 %v1752
      %v1791 = vpop.f32.mrf.mxu0
      %v1792 = vadd.f32 0.0, %v1791
      %v1793 = vpop.f32.mrf.mxu0
      %v1794 = vpop.f32.mrf.mxu0
      %v1795 = vadd.f32 0.0, %v1794
      %v1796 = vpop.f32.mrf.mxu0
      %1797 = vdwg.mxu0
      %v1798 = vadd.f32 %v1697, %v1792
      %v1799 = vadd.f32 %v1698, %v1795
      %v1800 = vld [vmem:[%s342 + $0x8] sm:$0x7]
      %s1801 = scalar_lea.vmem %s3, 220
      %v1802 = vld [vmem:[%s1801] sm:$0xf]
      %v1803 = vld [vmem:[%s1801 + $0x4] sm:$0xf]
      %v1804 = vld [vmem:[%s1801 + $0x8] sm:$0xf]
      %v1805 = vld [vmem:[%s1801 + $0xc] sm:$0xf]
      %v1806 = vld [vmem:[%s1801 + $0x10] sm:$0xf]
      %v1807 = vld [vmem:[%s1801 + $0x14] sm:$0xf]
      %v1808 = vld [vmem:[%s1801 + $0x18] sm:$0xf]
      %v1809 = vld [vmem:[%s1801 + $0x1c] sm:$0xf]
      %v1810 = vld [vmem:[%s1801 + $0x20] sm:$0xf]
      %v1811 = vld [vmem:[%s1801 + $0x24] sm:$0xf]
      %v1812 = vld [vmem:[%s1801 + $0x28] sm:$0xf]
      %v1814 = vunpack.c.l.b16 %v1800
      %v1815 = vpack.c.b16 %v1814, %v1814
      %v1817 = vshrl.u32 %v1714, 16
      %v1819 = vrot.slane %v1817, 2
      %v1820 = vshll.u32 %v1714, 16
      %v1822 = vrot.slane %v1820, 3
      %v1823 = vor.u32 %v1819, %v1822
      %v1825 = vshrl.u32 %v1815, 16
      %v1827 = vrot.slane %v1825, 2
      %v1828 = vshll.u32 %v1815, 16
      %v1830 = vrot.slane %v1828, 3
      %v1831 = vor.u32 %v1827, %v1830
      %v1832 = vsel %vm1155, %v1823, %v1831
      %v1844 = vunpack.c.l.b16 %v1802
      %v1845 = vunpack.c.l.b16 %v1803
      %v1846 = vunpack.c.l.b16 %v1804
      %v1847 = vunpack.c.l.b16 %v1805
      %v1848 = vunpack.c.l.b16 %v1806
      %v1849 = vunpack.c.l.b16 %v1807
      %v1850 = vunpack.c.l.b16 %v1808
      %v1851 = vunpack.c.l.b16 %v1809
      %v1852 = vunpack.c.l.b16 %v1810
      %v1853 = vunpack.c.l.b16 %v1811
      %v1854 = vunpack.c.l.b16 %v1812
      %v1855 = vpack.c.b16 %v1845, %v1844
      %v1856 = vpack.c.b16 %v1847, %v1846
      %v1857 = vpack.c.b16 %v1849, %v1848
      %v1858 = vpack.c.b16 %v1851, %v1850
      %v1859 = vpack.c.b16 %v1853, %v1852
      %v1860 = vpack.c.b16 %v1854, %v1854
      %v1867 = vsel %vm425, %v1832, 0
      %v1870 = vsel %vm429, %v1860, 0
      %1872 = vmatprep.subr.bf16.mxu0 0
      %1873 = vmatpush1.bf16.msra.mxu0 0
      %1874 = vmatprep.subr.bf16.mxu0 0
      %1875 = vmatpush1.bf16.msra.mxu0 0
      %1876 = vmatprep.subr.bf16.mxu0 0
      %1877 = vmatpush1.bf16.msra.mxu0 %v1870
      %1878 = vmatprep.subr.bf16.mxu0 0
      %1879 = vmatpush1.bf16.msra.mxu0 %v1859
      %1880 = vmatprep.subr.bf16.mxu0 0
      %1881 = vmatpush1.bf16.msra.mxu0 %v1858
      %1882 = vmatprep.subr.bf16.mxu0 0
      %1883 = vmatpush1.bf16.msra.mxu0 %v1857
      %1884 = vmatprep.subr.bf16.mxu0 0
      %1885 = vmatpush1.bf16.msra.mxu0 %v1856
      %1886 = vmatprep.subr.bf16.mxu0 0
      %1887 = vmatpush1.bf16.msra.mxu0 %v1855
      %1888 = vmatprep.subr.bf16.mxu0 0
      %1889 = vmatpush2.bf16.msra.mxu0 0
      %1890 = vmatprep.subr.bf16.mxu0 0
      %1891 = vmatpush2.bf16.msra.mxu0 0
      %1892 = vmatprep.subr.bf16.mxu0 0
      %1893 = vmatpush2.bf16.msra.mxu0 0
      %1894 = vmatprep.subr.bf16.mxu0 0
      %1895 = vmatpush2.bf16.msra.mxu0 0
      %1896 = vmatprep.subr.bf16.mxu0 0
      %1897 = vmatpush2.bf16.msra.mxu0 0
      %1898 = vmatprep.subr.bf16.mxu0 0
      %1899 = vmatpush2.bf16.msra.mxu0 0
      %1900 = vmatprep.subr.bf16.mxu0 0
      %1901 = vmatpush2.bf16.msra.mxu0 0
      %1902 = vmatprep.subr.bf16.mxu0 0
      %1903 = vmatpush2.bf16.msra.mxu0 0
      %1904 = vmatprep.mubr.bf16.mxu0 0
      %1905 = vmatmul.mubr.bf16.gmra.mxu0 %v1867
      %v1906 = vpop.f32.mrf.mxu0
      %v1907 = vadd.f32 0.0, %v1906
      %v1908 = vpop.f32.mrf.mxu0
      %v1909 = vpop.f32.mrf.mxu0
      %v1910 = vadd.f32 0.0, %v1909
      %v1911 = vpop.f32.mrf.mxu0
      %1912 = vdwg.mxu0
      %v1913 = vadd.f32 %v1798, %v1907
      %v1914 = vadd.f32 %v1799, %v1910
      %v1915 = vld [vmem:[%s342] sm:$0x8]
      %s1916 = scalar_lea.vmem %s3, 264
      %v1917 = vld [vmem:[%s1916] sm:$0xf]
      %v1918 = vld [vmem:[%s1916 + $0x4] sm:$0xf]
      %v1919 = vld [vmem:[%s1916 + $0x8] sm:$0xf]
      %v1920 = vld [vmem:[%s1916 + $0xc] sm:$0xf]
      %v1921 = vld [vmem:[%s1916 + $0x10] sm:$0xf]
      %v1922 = vld [vmem:[%s1916 + $0x14] sm:$0xf]
      %v1923 = vld [vmem:[%s1916 + $0x18] sm:$0xf]
      %v1924 = vld [vmem:[%s1916 + $0x1c] sm:$0xf]
      %v1925 = vld [vmem:[%s1916 + $0x20] sm:$0xf]
      %v1926 = vld [vmem:[%s1916 + $0x24] sm:$0xf]
      %v1927 = vld [vmem:[%s1916 + $0x28] sm:$0xf]
      %v1929 = vunpack.c.l.b16 %v1915
      %v1930 = vpack.c.b16 %v1385, %v1929
      %vm1931 = vcmask 1044480
      %v1932 = vrot.slane %v1930, 3
      %v1933 = vrot.slane %v1815, 3
      %v1934 = vsel %vm1931, %v1932, %v1933
      %v1946 = vunpack.c.l.b16 %v1917
      %v1947 = vunpack.c.l.b16 %v1918
      %v1948 = vunpack.c.l.b16 %v1919
      %v1949 = vunpack.c.l.b16 %v1920
      %v1950 = vunpack.c.l.b16 %v1921
      %v1951 = vunpack.c.l.b16 %v1922
      %v1952 = vunpack.c.l.b16 %v1923
      %v1953 = vunpack.c.l.b16 %v1924
      %v1954 = vunpack.c.l.b16 %v1925
      %v1955 = vunpack.c.l.b16 %v1926
      %v1956 = vunpack.c.l.b16 %v1927
      %v1957 = vpack.c.b16 %v1947, %v1946
      %v1958 = vpack.c.b16 %v1949, %v1948
      %v1959 = vpack.c.b16 %v1951, %v1950
      %v1960 = vpack.c.b16 %v1953, %v1952
      %v1961 = vpack.c.b16 %v1955, %v1954
      %v1962 = vpack.c.b16 %v1956, %v1956
      %v1969 = vsel %vm425, %v1934, 0
      %v1972 = vsel %vm429, %v1962, 0
      %1974 = vmatprep.subr.bf16.mxu0 0
      %1975 = vmatpush1.bf16.msra.mxu0 0
      %1976 = vmatprep.subr.bf16.mxu0 0
      %1977 = vmatpush1.bf16.msra.mxu0 0
      %1978 = vmatprep.subr.bf16.mxu0 0
      %1979 = vmatpush1.bf16.msra.mxu0 %v1972
      %1980 = vmatprep.subr.bf16.mxu0 0
      %1981 = vmatpush1.bf16.msra.mxu0 %v1961
      %1982 = vmatprep.subr.bf16.mxu0 0
      %1983 = vmatpush1.bf16.msra.mxu0 %v1960
      %1984 = vmatprep.subr.bf16.mxu0 0
      %1985 = vmatpush1.bf16.msra.mxu0 %v1959
      %1986 = vmatprep.subr.bf16.mxu0 0
      %1987 = vmatpush1.bf16.msra.mxu0 %v1958
      %1988 = vmatprep.subr.bf16.mxu0 0
      %1989 = vmatpush1.bf16.msra.mxu0 %v1957
      %1990 = vmatprep.subr.bf16.mxu0 0
      %1991 = vmatpush2.bf16.msra.mxu0 0
      %1992 = vmatprep.subr.bf16.mxu0 0
      %1993 = vmatpush2.bf16.msra.mxu0 0
      %1994 = vmatprep.subr.bf16.mxu0 0
      %1995 = vmatpush2.bf16.msra.mxu0 0
      %1996 = vmatprep.subr.bf16.mxu0 0
      %1997 = vmatpush2.bf16.msra.mxu0 0
      %1998 = vmatprep.subr.bf16.mxu0 0
      %1999 = vmatpush2.bf16.msra.mxu0 0
      %2000 = vmatprep.subr.bf16.mxu0 0
      %2001 = vmatpush2.bf16.msra.mxu0 0
      %2002 = vmatprep.subr.bf16.mxu0 0
      %2003 = vmatpush2.bf16.msra.mxu0 0
      %2004 = vmatprep.subr.bf16.mxu0 0
      %2005 = vmatpush2.bf16.msra.mxu0 0
      %2006 = vmatprep.mubr.bf16.mxu0 0
      %2007 = vmatmul.mubr.bf16.gmra.mxu0 %v1969
      %v2008 = vpop.f32.mrf.mxu0
      %v2009 = vadd.f32 0.0, %v2008
      %v2010 = vpop.f32.mrf.mxu0
      %v2011 = vpop.f32.mrf.mxu0
      %v2012 = vadd.f32 0.0, %v2011
      %v2013 = vpop.f32.mrf.mxu0
      %2014 = vdwg.mxu0
      %v2015 = vadd.f32 %v1913, %v2009
      %v2016 = vadd.f32 %v1914, %v2012
      %v2017 = vmax.f32 %v2015, 0.0
      %v2018 = vmax.f32 %v2016, 0.0
      %2019 = vst [vmem:[%s357] sm:$0xff] %v2017
      %2020 = vst [vmem:[%s357 + $0x8] sm:$0xff] %v2018
      %p2021 = scmp.lt.s32.totalorder %s21, 1
      %s2022 = scalar_select %p2021, %s21, 1
      %s2023 = smul.addr %s2022, 2
      %s2024 = smul.addr %s2023, 8
      %s2025 = scalar_lea.vmem %s7, %s2024
      %p2026 = scmp.lt.s32.totalorder %s21, 1
      %s2027 = scalar_select %p2026, %s21, 1
      %s2028 = smul.addr %s2027, 2
      %s2029 = smul.addr %s2028, 8
      %s2030 = scalar_lea.vmem %s8, %s2029
      %p2031 = scmp.lt.s32.totalorder %s21, 1
      %s2032 = scalar_select %p2031, %s21, 1
      %s2033 = smul.addr %s2032, 2
      %s2034 = smul.addr %s2033, 8
      %s2035 = scalar_lea.vmem %s9, %s2034
      // Predicated region
      $region49: #{msag_forward.1} parent=47 // pred_check
        %p2036 = pneg %p191
      $region50: #{msag_forward.1} parent=47 // pred_check_branch
        %2038 = sbr.rel (%p2036) target = $region52
      $region51: #{msag_forward.1} parent=47 // pred_region
        _
      $region52: #{msag_forward.1} parent=47 // pred_fallthru
        _
      // Predicated region
      $region53: #{msag_forward.1} parent=47 // pred_check
        %p2039 = pneg %p217
      $region54: #{msag_forward.1} parent=47 // pred_check_branch
        %2041 = sbr.rel (%p2039) target = $region56
      $region55: #{msag_forward.1} parent=47 // pred_region
        _
      $region56: #{msag_forward.1} parent=47 // pred_fallthru
        _
      // Predicated region
      $region57: #{msag_forward.1} parent=47 // pred_check
        %p2042 = pneg %p243
      $region58: #{msag_forward.1} parent=47 // pred_check_branch
        %2044 = sbr.rel (%p2042) target = $region60
      $region59: #{msag_forward.1} parent=47 // pred_region
        _
      $region60: #{msag_forward.1} parent=47 // pred_fallthru
        _
    $region48: #{msag_forward.1} parent=5 // pred_fallthru
      _
    %p2045 = scmp.le.s32.totalorder 2, %s16
    // Predicated region
    $region61: #{msag_forward.1} parent=5 // pred_check
      %p2046 = pneg %p2045
    $region62: #{msag_forward.1} parent=5 // pred_check_branch
      %2048 = sbr.rel (%p2046) target = $region64
    $region63: #{msag_forward.1} parent=5 // pred_region
      %s2049 = ssub.s32 %s16, 2
      // Predicated region
      $region65: #{msag_forward.1} parent=63 // pred_check
        %p2050 = pneg %p197
      $region66: #{msag_forward.1} parent=63 // pred_check_branch
        %2052 = sbr.rel (%p2050) target = $region68
      $region67: #{msag_forward.1} parent=63 // pred_region
        %p2053 = scmp.lt.s32.totalorder %s22, 1
        %s2054 = scalar_select %p2053, %s22, 1
        %s2055 = smul.addr %s2054, 2
        %s2056 = smul.addr %s2055, 8
        %s2057 = scalar_lea.vmem %s7, %s2056
      $region68: #{msag_forward.1} parent=63 // pred_fallthru
        _
      // Predicated region
      $region69: #{msag_forward.1} parent=63 // pred_check
        %p2058 = pneg %p223
      $region70: #{msag_forward.1} parent=63 // pred_check_branch
        %2060 = sbr.rel (%p2058) target = $region72
      $region71: #{msag_forward.1} parent=63 // pred_region
        %p2061 = scmp.lt.s32.totalorder %s22, 1
        %s2062 = scalar_select %p2061, %s22, 1
        %s2063 = smul.addr %s2062, 2
        %s2064 = smul.addr %s2063, 8
        %s2065 = scalar_lea.vmem %s8, %s2064
      $region72: #{msag_forward.1} parent=63 // pred_fallthru
        _
      // Predicated region
      $region73: #{msag_forward.1} parent=63 // pred_check
        %p2066 = pneg %p249
      $region74: #{msag_forward.1} parent=63 // pred_check_branch
        %2068 = sbr.rel (%p2066) target = $region76
      $region75: #{msag_forward.1} parent=63 // pred_region
        %p2069 = scmp.lt.s32.totalorder %s22, 1
        %s2070 = scalar_select %p2069, %s22, 1
        %s2071 = smul.addr %s2070, 2
        %s2072 = smul.addr %s2071, 8
        %s2073 = scalar_lea.vmem %s9, %s2072
      $region76: #{msag_forward.1} parent=63 // pred_fallthru
        _
    $region64: #{msag_forward.1} parent=5 // pred_fallthru
      _
  $region6: #{msag_forward.1} parent=0 // loop_footer
    %s20 = sadd.s32 1, %s16
  $region7: #{msag_forward.1} parent=0 // loop_footer_branch
    %15 = sbr.rel target = $region3
  $region8: #{msag_forward.1} parent=0 // loop_exit
    _

</llo_original>
